<compile_context>
chip_gen: v5e
topology: v5e:2x2
jax: 0.10.0
libtpu: 0.0.40
codegen_flags: <defaults>
</compile_context>

<pallas_src>
import jax
import jax.numpy as jnp
import numpy as np
from jax.experimental import pallas as pl
from jax.experimental.pallas import tpu as pltpu


def _round_up(x, m):
    return ((x + m - 1) // m) * m


def _tpu_num_tensorcores():
    """TensorCores per chip: 2 on v7x, else 1 (v5e / v6e)."""
    try:
        kind = jax.devices()[0].device_kind.lower()
        if "v7" in kind:
            return 2
    except Exception:
        pass
    return 1


def _tpu_vmem_bytes():
    """Per-core VMEM capacity; conservative fallback if the query fails."""
    try:
        cap = getattr(pltpu.get_tpu_info(), "vmem_capacity_bytes", None)
        if cap:
            return int(cap)
    except Exception:
        pass
    return 64 * 1024 * 1024  # v7x-safe fallback


# ----------------------------------------------------------------------------
# Kernel
# ----------------------------------------------------------------------------
def make_textcnn_kernel(L, E, O, kernel_sizes, KMAX, T_steps, TB, NKO):
    """Fused-branch TextCNN kernel: one [TB, KMAX*E] @ [KMAX*E, NKO] matmul
    per time step, running max over time, bias+ReLU, then one FC matmul."""

    def kernel(x_ref, wall_ref, ball_ref, wfc_ref, bfc_ref, o_ref):
        wall = wall_ref[...]                       # [KMAX*E, NKO]  bf16
        lane = None                                # hoisted iota (built once)
        accs = [None, None]                        # even / odd-t running maxima

        # TODO(synk): for L in the hundreds, switch this fully unrolled loop
        # to lax.fori_loop(..., unroll=4/8) to bound code size / vreg pressure.
        for t in range(T_steps):
            window = x_ref[:, t * E:(t + KMAX) * E]       # [TB, KMAX*E] bf16
            zt = jnp.dot(window, wall,
                         preferred_element_type=jnp.float32)   # [TB, NKO] f32

            # Mask time steps that are out of range for a branch (t > L - k)
            # to -inf before the max — required because the fused window uses
            # zero-padded time steps there.
            valid = [t <= L - k for k in kernel_sizes]
            if not all(valid):
                if lane is None:
                    lane = jax.lax.broadcasted_iota(jnp.int32, (TB, NKO), 1)
                nvalid = sum(valid)
                if all(valid[:nvalid]) and not any(valid[nvalid:]):
                    cond = lane < nvalid * O       # ascending k -> prefix mask
                else:
                    cond = None
                    for i, v in enumerate(valid):
                        if v:
                            c = (lane >= i * O) & (lane < (i + 1) * O)
                            cond = c if cond is None else (cond | c)
                zt = jnp.where(cond, zt, -jnp.inf)

            s = t & 1
            accs[s] = zt if accs[s] is None else jnp.maximum(accs[s], zt)

        m = accs[0] if accs[1] is None else jnp.maximum(accs[0], accs[1])

        # bias + ReLU commuted past max-over-time (ReLU monotone, bias
        # time-invariant): acts on [TB, NKO] instead of [TB, L_out, O].
        feat = jnp.maximum(m + ball_ref[...], 0.0)                # [TB, NKO]

        out = jnp.dot(feat.astype(jnp.bfloat16), wfc_ref[...],
                      preferred_element_type=jnp.float32)         # [TB, Cp]
        o_ref[...] = out + bfc_ref[...]

    return kernel


# ----------------------------------------------------------------------------
# Wrapper
# ----------------------------------------------------------------------------
def textcnn_forward(embedded, conv_ws, conv_bs, wfc, bfc,
                    tb_max=128, single_buffer_weights=True):
    """embedded: [B, L, E] f32; conv_ws[i]: [k_i, E, O]; conv_bs[i]: [O];
    wfc: [n_k*O, C]; bfc: [C].  Returns [B, C] f32."""
    B, L, E = embedded.shape
    O = int(conv_ws[0].shape[-1])
    C = int(wfc.shape[-1])
    kernel_sizes = [int(w.shape[0]) for w in conv_ws]
    n_k = len(kernel_sizes)
    KMAX = max(kernel_sizes)
    kmin = min(kernel_sizes)
    NKO = n_k * O
    Cp = _round_up(C, 128)               # lane-dense output block
    T_steps = L - kmin + 1               # time steps covering all branches
    Lp = L + (KMAX - kmin)               # zero-padded time length

    # ---- generation-aware batch tiling --------------------------------------
    B8 = _round_up(B, 8)
    num_tc = _tpu_num_tensorcores()
    if num_tc >= 2 and B8 >= 8 * num_tc:
        # v7x: split so both TensorCores get work.
        TB = min(tb_max, max(8, _round_up(pl.cdiv(B8, num_tc), 8)))
    else:
        # v5e/v6e (single TC) or tiny batch: one tile, minimum grid steps.
        # TODO(synk): for tiny B on v7x a second "parallel" grid axis (over
        # time/branch chunks) could occupy the 2nd TensorCore; skipped here.
        TB = min(tb_max, B8)

    # Cap the tile against VMEM (x/out double-buffered; weights 1x or 2x).
    weight_bufs = 1 if single_buffer_weights else 2
    weights_bytes = weight_bufs * (KMAX * E * NKO * 2 + NKO * 4
                                   + NKO * Cp * 2 + Cp * 4)

    def _tile_bytes(tb):
        return 2 * (tb * Lp * E * 2) + 2 * (tb * Cp * 4) + weights_bytes

    vmem_cap = _tpu_vmem_bytes()
    budget = vmem_cap // 2
    while TB > 8 and _tile_bytes(TB) > budget:
        TB = max(8, _round_up(TB // 2, 8))
    B_pad = _round_up(B8, TB)

    # ---- operand prep (folds into the surrounding jit) ----------------------
    x = embedded.astype(jnp.float32)
    x = jnp.pad(x, ((0, B_pad - B), (0, Lp - L), (0, 0)))       # pad batch+time
    x2 = x.reshape(B_pad, Lp * E).astype(jnp.bfloat16)

    # Fuse branches: zero-pad taps to KMAX, concat along N -> [KMAX*E, n_k*O].
    w_parts = []
    for w, k in zip(conv_ws, kernel_sizes):
        wp = jnp.pad(w.astype(jnp.float32), ((0, KMAX - k), (0, 0), (0, 0)))
        w_parts.append(wp.reshape(KMAX * E, O))
    wall = jnp.concatenate(w_parts, axis=1).astype(jnp.bfloat16)   # [KMAX*E,NKO]
    ball = jnp.concatenate([b.astype(jnp.float32)
                            for b in conv_bs]).reshape(1, NKO)      # f32 bias
    wfc_all = jnp.pad(wfc.astype(jnp.float32),
                      ((0, 0), (0, Cp - C))).astype(jnp.bfloat16)   # [NKO, Cp]
    bfc_p = jnp.pad(bfc.astype(jnp.float32), (0, Cp - C)).reshape(1, Cp)

    const_map = lambda b: (0, 0)
    wkw = ({"pipeline_mode": pl.Buffered(1)}     # weights DMA'd once
           if single_buffer_weights else {})
    in_specs = [
        pl.BlockSpec((TB, Lp * E), lambda b: (b, 0)),
        pl.BlockSpec((KMAX * E, NKO), const_map, **wkw),
        pl.BlockSpec((1, NKO), const_map, **wkw),
        pl.BlockSpec((NKO, Cp), const_map, **wkw),
        pl.BlockSpec((1, Cp), const_map, **wkw),
    ]

    kernel = make_textcnn_kernel(L, E, O, kernel_sizes, KMAX, T_steps, TB, NKO)

    out = pl.pallas_call(
        kernel,
        out_shape=jax.ShapeDtypeStruct((B_pad, Cp), jnp.float32),
        grid=(B_pad // TB,),
        in_specs=in_specs,
        out_specs=pl.BlockSpec((TB, Cp), lambda b: (b, 0)),
        compiler_params=pltpu.CompilerParams(
            dimension_semantics=("parallel",),
            vmem_limit_bytes=int(min(vmem_cap,
                                     max(4 * _tile_bytes(TB),
                                         32 * 1024 * 1024)))),
    )(x2, wall, ball, wfc_all, bfc_p)

    return out[:B, :C]


# ----------------------------------------------------------------------------
# Pure-JAX reference (mirrors the PyTorch forward exactly, f32 math)
# ----------------------------------------------------------------------------
def reference_forward(x_ids, embeddings, conv_ws, conv_bs, wfc, bfc):
    emb = embeddings[x_ids].astype(jnp.float32)           # [B, L, E]
    B, L, _ = emb.shape
    feats = []
    for w, b in zip(conv_ws, conv_bs):
        k, _, O = w.shape
        L_out = L - k + 1
        acc = jnp.zeros((B, L_out, O), jnp.float32)
        for j in range(k):
            acc = acc + jnp.einsum('ble,eo->blo', emb[:, j:j + L_out, :], w[j])
        acc = jnp.maximum(acc + b[None, None, :], 0.0)     # bias + ReLU
        feats.append(jnp.max(acc, axis=1))                 # max over time
    feat = jnp.concatenate(feats, axis=1)                  # [B, n_k*O]
    return feat @ wfc + bfc[None, :]


# ----------------------------------------------------------------------------
# Main
# ----------------------------------------------------------------------------
if __name__ == "__main__":
    VOCAB = 50
    B, L = 2, 8               # batch, sequence length (token ids)
    E = 32                    # embedding_size (small test size)
    O = 128                   # out_channels
    C = 4                     # num_classes
    KMIN, KMAXK = 1, 4        # kernel_range
    kernel_sizes = list(range(KMIN, KMAXK + 1))

    key = jax.random.PRNGKey(0)
    k_emb, k_ids, k_fcw, k_fcb, *k_convs = jax.random.split(
        key, 4 + 2 * len(kernel_sizes))

    embeddings = jax.random.normal(k_emb, (VOCAB, E), dtype=jnp.float32) * 0.5
    x_ids = jax.random.randint(k_ids, (B, L), 0, VOCAB, dtype=jnp.int32)

    conv_ws, conv_bs = [], []
    for i, k in enumerate(kernel_sizes):
        kw_, kb_ = k_convs[2 * i], k_convs[2 * i + 1]
        # torch Conv1d weight [O, E, k] -> kernel layout [k, E, O]
        conv_ws.append(jax.random.normal(kw_, (k, E, O), dtype=jnp.float32)
                       * (1.0 / np.sqrt(E * k)))
        conv_bs.append(jax.random.normal(kb_, (O,), dtype=jnp.float32) * 0.1)

    # torch Linear weight [C, n_k*O] -> kernel layout [n_k*O, C]
    wfc = jax.random.normal(k_fcw, (len(kernel_sizes) * O, C),
                            dtype=jnp.float32) \
        * (1.0 / np.sqrt(len(kernel_sizes) * O))
    bfc = jax.random.normal(k_fcb, (C,), dtype=jnp.float32) * 0.1

    # TODO(synk): the nn.Embedding gather stays in plain JAX (tiny-vocab gather
    # has no clean Pallas win); everything downstream runs in the Pallas kernel.
    embedded = embeddings[x_ids].astype(jnp.float32)       # [B, L, E]

    fwd_fast = jax.jit(lambda e: textcnn_forward(
        e, conv_ws, conv_bs, wfc, bfc, single_buffer_weights=True))
    fwd_safe = jax.jit(lambda e: textcnn_forward(
        e, conv_ws, conv_bs, wfc, bfc, single_buffer_weights=False))
    try:
        out = jax.block_until_ready(fwd_fast(embedded))
    except Exception:
        # Fallback if single-buffered (pl.Buffered(1)) weight specs are not
        # supported by this Pallas/Mosaic build.
        out = jax.block_until_ready(fwd_safe(embedded))

    ref = jax.block_until_ready(
        reference_forward(x_ids, embeddings, conv_ws, conv_bs, wfc, bfc))

    # bf16 MXU operands with f32 accumulation -> relaxed tolerance.
    np.testing.assert_allclose(np.asarray(out), np.asarray(ref),
                               rtol=2e-2, atol=5e-2)

    print("KERNEL_OK")
</pallas_src>

<mosaic_0001>
module attributes {stable_mosaic.version = 11 : i64} {
  func.func @kernel(%arg0: i32, %arg1: memref<8x352xbf16, #tpu.memory_space<vmem>>, %arg2: memref<128x512xbf16, #tpu.memory_space<vmem>>, %arg3: memref<1x512xf32, #tpu.memory_space<vmem>>, %arg4: memref<512x128xbf16, #tpu.memory_space<vmem>>, %arg5: memref<1x128xf32, #tpu.memory_space<vmem>>, %arg6: memref<8x128xf32, #tpu.memory_space<vmem>>) attributes {dimension_semantics = [#tpu.dimension_semantics<parallel>], iteration_bounds = array<i64: 1>, scalar_prefetch = 0 : i64, scratch_operands = 0 : i64, tpu.core_type = #tpu.core_type<tc>, window_params = [{transform_indices = @transform_0, window_bounds = array<i64: 8, 352>}, {pipeline_mode = #tpu.pipeline_mode<synchronous>, transform_indices = @transform_1, window_bounds = array<i64: 128, 512>}, {pipeline_mode = #tpu.pipeline_mode<synchronous>, transform_indices = @transform_2, window_bounds = array<i64: 1, 512>}, {pipeline_mode = #tpu.pipeline_mode<synchronous>, transform_indices = @transform_3, window_bounds = array<i64: 512, 128>}, {pipeline_mode = #tpu.pipeline_mode<synchronous>, transform_indices = @transform_4, window_bounds = array<i64: 1, 128>}, {transform_indices = @transform_5, window_bounds = array<i64: 8, 128>}]} {
    %c0 = arith.constant 0 : index
    %c0_0 = arith.constant 0 : index
    %0 = vector.load %arg2[%c0, %c0_0] : memref<128x512xbf16, #tpu.memory_space<vmem>>, vector<128x512xbf16>
    %c0_1 = arith.constant 0 : index
    %c0_2 = arith.constant 0 : index
    %1 = vector.load %arg1[%c0_1, %c0_2] : memref<8x352xbf16, #tpu.memory_space<vmem>>, vector<8x128xbf16>
    %cst = arith.constant dense<0.000000e+00> : vector<8x512xf32>
    %2 = tpu.matmul %1, %0, %cst {dimension_numbers = #tpu.dot_dimension_numbers<[1], [0], [0], [1], [0, 0, 1, 1], [], []>} : vector<8x128xbf16>, vector<128x512xbf16>, vector<8x512xf32> -> vector<8x512xf32>
    %c0_3 = arith.constant 0 : index
    %c32 = arith.constant 32 : index
    %3 = vector.load %arg1[%c0_3, %c32] : memref<8x352xbf16, #tpu.memory_space<vmem>>, vector<8x128xbf16>
    %cst_4 = arith.constant dense<0.000000e+00> : vector<8x512xf32>
    %4 = tpu.matmul %3, %0, %cst_4 {dimension_numbers = #tpu.dot_dimension_numbers<[1], [0], [0], [1], [0, 0, 1, 1], [], []>} : vector<8x128xbf16>, vector<128x512xbf16>, vector<8x512xf32> -> vector<8x512xf32>
    %c0_5 = arith.constant 0 : index
    %c64 = arith.constant 64 : index
    %5 = vector.load %arg1[%c0_5, %c64] : memref<8x352xbf16, #tpu.memory_space<vmem>>, vector<8x128xbf16>
    %cst_6 = arith.constant dense<0.000000e+00> : vector<8x512xf32>
    %6 = tpu.matmul %5, %0, %cst_6 {dimension_numbers = #tpu.dot_dimension_numbers<[1], [0], [0], [1], [0, 0, 1, 1], [], []>} : vector<8x128xbf16>, vector<128x512xbf16>, vector<8x512xf32> -> vector<8x512xf32>
    %7 = arith.maximumf %2, %6 : vector<8x512xf32>
    %c0_7 = arith.constant 0 : index
    %c96 = arith.constant 96 : index
    %8 = vector.load %arg1[%c0_7, %c96] : memref<8x352xbf16, #tpu.memory_space<vmem>>, vector<8x128xbf16>
    %cst_8 = arith.constant dense<0.000000e+00> : vector<8x512xf32>
    %9 = tpu.matmul %8, %0, %cst_8 {dimension_numbers = #tpu.dot_dimension_numbers<[1], [0], [0], [1], [0, 0, 1, 1], [], []>} : vector<8x128xbf16>, vector<128x512xbf16>, vector<8x512xf32> -> vector<8x512xf32>
    %10 = arith.maximumf %4, %9 : vector<8x512xf32>
    %c0_9 = arith.constant 0 : index
    %c128 = arith.constant 128 : index
    %11 = vector.load %arg1[%c0_9, %c128] : memref<8x352xbf16, #tpu.memory_space<vmem>>, vector<8x128xbf16>
    %cst_10 = arith.constant dense<0.000000e+00> : vector<8x512xf32>
    %12 = tpu.matmul %11, %0, %cst_10 {dimension_numbers = #tpu.dot_dimension_numbers<[1], [0], [0], [1], [0, 0, 1, 1], [], []>} : vector<8x128xbf16>, vector<128x512xbf16>, vector<8x512xf32> -> vector<8x512xf32>
    %13 = arith.maximumf %7, %12 : vector<8x512xf32>
    %c0_11 = arith.constant 0 : index
    %c160 = arith.constant 160 : index
    %14 = vector.load %arg1[%c0_11, %c160] : memref<8x352xbf16, #tpu.memory_space<vmem>>, vector<8x128xbf16>
    %cst_12 = arith.constant dense<0.000000e+00> : vector<8x512xf32>
    %15 = tpu.matmul %14, %0, %cst_12 {dimension_numbers = #tpu.dot_dimension_numbers<[1], [0], [0], [1], [0, 0, 1, 1], [], []>} : vector<8x128xbf16>, vector<128x512xbf16>, vector<8x512xf32> -> vector<8x512xf32>
    %16 = tpu.iota {dimensions = array<i32: 1>} : vector<8x512xi32>
    %c384_i32 = arith.constant 384 : i32
    %17 = vector.broadcast %c384_i32 : i32 to vector<8x512xi32>
    %18 = arith.cmpi slt, %16, %17 : vector<8x512xi32>
    %cst_13 = arith.constant 0xFF800000 : f32
    %19 = vector.broadcast %cst_13 : f32 to vector<8x512xf32>
    %20 = arith.select %18, %15, %19 : vector<8x512xi1>, vector<8x512xf32>
    %21 = arith.maximumf %10, %20 : vector<8x512xf32>
    %c0_14 = arith.constant 0 : index
    %c192 = arith.constant 192 : index
    %22 = vector.load %arg1[%c0_14, %c192] : memref<8x352xbf16, #tpu.memory_space<vmem>>, vector<8x128xbf16>
    %cst_15 = arith.constant dense<0.000000e+00> : vector<8x512xf32>
    %23 = tpu.matmul %22, %0, %cst_15 {dimension_numbers = #tpu.dot_dimension_numbers<[1], [0], [0], [1], [0, 0, 1, 1], [], []>} : vector<8x128xbf16>, vector<128x512xbf16>, vector<8x512xf32> -> vector<8x512xf32>
    %c256_i32 = arith.constant 256 : i32
    %24 = vector.broadcast %c256_i32 : i32 to vector<8x512xi32>
    %25 = arith.cmpi slt, %16, %24 : vector<8x512xi32>
    %cst_16 = arith.constant 0xFF800000 : f32
    %26 = vector.broadcast %cst_16 : f32 to vector<8x512xf32>
    %27 = arith.select %25, %23, %26 : vector<8x512xi1>, vector<8x512xf32>
    %28 = arith.maximumf %13, %27 : vector<8x512xf32>
    %c0_17 = arith.constant 0 : index
    %c224 = arith.constant 224 : index
    %29 = vector.load %arg1[%c0_17, %c224] : memref<8x352xbf16, #tpu.memory_space<vmem>>, vector<8x128xbf16>
    %cst_18 = arith.constant dense<0.000000e+00> : vector<8x512xf32>
    %30 = tpu.matmul %29, %0, %cst_18 {dimension_numbers = #tpu.dot_dimension_numbers<[1], [0], [0], [1], [0, 0, 1, 1], [], []>} : vector<8x128xbf16>, vector<128x512xbf16>, vector<8x512xf32> -> vector<8x512xf32>
    %c128_i32 = arith.constant 128 : i32
    %31 = vector.broadcast %c128_i32 : i32 to vector<8x512xi32>
    %32 = arith.cmpi slt, %16, %31 : vector<8x512xi32>
    %cst_19 = arith.constant 0xFF800000 : f32
    %33 = vector.broadcast %cst_19 : f32 to vector<8x512xf32>
    %34 = arith.select %32, %30, %33 : vector<8x512xi1>, vector<8x512xf32>
    %35 = arith.maximumf %21, %34 : vector<8x512xf32>
    %36 = arith.maximumf %28, %35 : vector<8x512xf32>
    %c0_20 = arith.constant 0 : index
    %c0_21 = arith.constant 0 : index
    %37 = vector.load %arg3[%c0_20, %c0_21] : memref<1x512xf32, #tpu.memory_space<vmem>>, vector<1x512xf32>
    %38 = vector.broadcast %37 : vector<1x512xf32> to vector<8x512xf32>
    %39 = arith.addf %36, %38 : vector<8x512xf32>
    %cst_22 = arith.constant 0.000000e+00 : f32
    %40 = vector.broadcast %cst_22 : f32 to vector<8x512xf32>
    %41 = arith.maximumf %39, %40 : vector<8x512xf32>
    %42 = arith.truncf %41 : vector<8x512xf32> to vector<8x512xbf16>
    %c0_23 = arith.constant 0 : index
    %c0_24 = arith.constant 0 : index
    %43 = vector.load %arg4[%c0_23, %c0_24] : memref<512x128xbf16, #tpu.memory_space<vmem>>, vector<512x128xbf16>
    %cst_25 = arith.constant dense<0.000000e+00> : vector<8x128xf32>
    %44 = tpu.matmul %42, %43, %cst_25 {dimension_numbers = #tpu.dot_dimension_numbers<[1], [0], [0], [1], [0, 0, 1, 1], [], []>} : vector<8x512xbf16>, vector<512x128xbf16>, vector<8x128xf32> -> vector<8x128xf32>
    %c0_26 = arith.constant 0 : index
    %c0_27 = arith.constant 0 : index
    %45 = vector.load %arg5[%c0_26, %c0_27] : memref<1x128xf32, #tpu.memory_space<vmem>>, vector<1x128xf32>
    %46 = vector.broadcast %45 : vector<1x128xf32> to vector<8x128xf32>
    %47 = arith.addf %44, %46 : vector<8x128xf32>
    %c0_28 = arith.constant 0 : index
    %c0_29 = arith.constant 0 : index
    %48 = vector.load %arg6[%c0_28, %c0_29] : memref<8x128xf32, #tpu.memory_space<vmem>>, vector<8x128xf32>
    tpu.vector_store %arg6[%c0_28, %c0_29], %47 {strides = array<i32>} : memref<8x128xf32, #tpu.memory_space<vmem>>, vector<8x128xf32>,
    return
  }
  func.func @transform_0(%arg0: i32) -> (i32, i32) {
    %c0_i32 = arith.constant 0 : i32
    %c0_i32_0 = arith.constant 0 : i32
    return %arg0, %c0_i32 : i32, i32
  }
  func.func @transform_1(%arg0: i32) -> (i32, i32) {
    %c0_i32 = arith.constant 0 : i32
    %c0_i32_0 = arith.constant 0 : i32
    %c0_i32_1 = arith.constant 0 : i32
    return %c0_i32, %c0_i32_0 : i32, i32
  }
  func.func @transform_2(%arg0: i32) -> (i32, i32) {
    %c0_i32 = arith.constant 0 : i32
    %c0_i32_0 = arith.constant 0 : i32
    %c0_i32_1 = arith.constant 0 : i32
    return %c0_i32, %c0_i32_0 : i32, i32
  }
  func.func @transform_3(%arg0: i32) -> (i32, i32) {
    %c0_i32 = arith.constant 0 : i32
    %c0_i32_0 = arith.constant 0 : i32
    %c0_i32_1 = arith.constant 0 : i32
    return %c0_i32, %c0_i32_0 : i32, i32
  }
  func.func @transform_4(%arg0: i32) -> (i32, i32) {
    %c0_i32 = arith.constant 0 : i32
    %c0_i32_0 = arith.constant 0 : i32
    %c0_i32_1 = arith.constant 0 : i32
    return %c0_i32, %c0_i32_0 : i32, i32
  }
  func.func @transform_5(%arg0: i32) -> (i32, i32) {
    %c0_i32 = arith.constant 0 : i32
    %c0_i32_0 = arith.constant 0 : i32
    return %arg0, %c0_i32 : i32, i32
  }
}

module attributes {stable_mosaic.version = 11 : i64} {
  func.func @kernel(%arg0: i32, %arg1: memref<8x352xbf16, #tpu.memory_space<vmem>>, %arg2: memref<128x512xbf16, #tpu.memory_space<vmem>>, %arg3: memref<1x512xf32, #tpu.memory_space<vmem>>, %arg4: memref<512x128xbf16, #tpu.memory_space<vmem>>, %arg5: memref<1x128xf32, #tpu.memory_space<vmem>>, %arg6: memref<8x128xf32, #tpu.memory_space<vmem>>) attributes {dimension_semantics = [#tpu.dimension_semantics<parallel>], iteration_bounds = array<i64: 1>, scalar_prefetch = 0 : i64, scratch_operands = 0 : i64, tpu.core_type = #tpu.core_type<tc>, window_params = [{transform_indices = @transform_0, window_bounds = array<i64: 8, 352>}, {pipeline_mode = #tpu.pipeline_mode<synchronous>, transform_indices = @transform_1, window_bounds = array<i64: 128, 512>}, {pipeline_mode = #tpu.pipeline_mode<synchronous>, transform_indices = @transform_2, window_bounds = array<i64: 1, 512>}, {pipeline_mode = #tpu.pipeline_mode<synchronous>, transform_indices = @transform_3, window_bounds = array<i64: 512, 128>}, {pipeline_mode = #tpu.pipeline_mode<synchronous>, transform_indices = @transform_4, window_bounds = array<i64: 1, 128>}, {transform_indices = @transform_5, window_bounds = array<i64: 8, 128>}]} {
    %c0 = arith.constant 0 : index
    %c0_0 = arith.constant 0 : index
    %0 = vector.load %arg2[%c0, %c0_0] : memref<128x512xbf16, #tpu.memory_space<vmem>>, vector<128x512xbf16>
    %c0_1 = arith.constant 0 : index
    %c0_2 = arith.constant 0 : index
    %1 = vector.load %arg1[%c0_1, %c0_2] : memref<8x352xbf16, #tpu.memory_space<vmem>>, vector<8x128xbf16>
    %cst = arith.constant dense<0.000000e+00> : vector<8x512xf32>
    %2 = tpu.matmul %1, %0, %cst {dimension_numbers = #tpu.dot_dimension_numbers<[1], [0], [0], [1], [0, 0, 1, 1], [], []>} : vector<8x128xbf16>, vector<128x512xbf16>, vector<8x512xf32> -> vector<8x512xf32>
    %c0_3 = arith.constant 0 : index
    %c32 = arith.constant 32 : index
    %3 = vector.load %arg1[%c0_3, %c32] : memref<8x352xbf16, #tpu.memory_space<vmem>>, vector<8x128xbf16>
    %cst_4 = arith.constant dense<0.000000e+00> : vector<8x512xf32>
    %4 = tpu.matmul %3, %0, %cst_4 {dimension_numbers = #tpu.dot_dimension_numbers<[1], [0], [0], [1], [0, 0, 1, 1], [], []>} : vector<8x128xbf16>, vector<128x512xbf16>, vector<8x512xf32> -> vector<8x512xf32>
    %c0_5 = arith.constant 0 : index
    %c64 = arith.constant 64 : index
    %5 = vector.load %arg1[%c0_5, %c64] : memref<8x352xbf16, #tpu.memory_space<vmem>>, vector<8x128xbf16>
    %cst_6 = arith.constant dense<0.000000e+00> : vector<8x512xf32>
    %6 = tpu.matmul %5, %0, %cst_6 {dimension_numbers = #tpu.dot_dimension_numbers<[1], [0], [0], [1], [0, 0, 1, 1], [], []>} : vector<8x128xbf16>, vector<128x512xbf16>, vector<8x512xf32> -> vector<8x512xf32>
    %7 = arith.maximumf %2, %6 : vector<8x512xf32>
    %c0_7 = arith.constant 0 : index
    %c96 = arith.constant 96 : index
    %8 = vector.load %arg1[%c0_7, %c96] : memref<8x352xbf16, #tpu.memory_space<vmem>>, vector<8x128xbf16>
    %cst_8 = arith.constant dense<0.000000e+00> : vector<8x512xf32>
    %9 = tpu.matmul %8, %0, %cst_8 {dimension_numbers = #tpu.dot_dimension_numbers<[1], [0], [0], [1], [0, 0, 1, 1], [], []>} : vector<8x128xbf16>, vector<128x512xbf16>, vector<8x512xf32> -> vector<8x512xf32>
    %10 = arith.maximumf %4, %9 : vector<8x512xf32>
    %c0_9 = arith.constant 0 : index
    %c128 = arith.constant 128 : index
    %11 = vector.load %arg1[%c0_9, %c128] : memref<8x352xbf16, #tpu.memory_space<vmem>>, vector<8x128xbf16>
    %cst_10 = arith.constant dense<0.000000e+00> : vector<8x512xf32>
    %12 = tpu.matmul %11, %0, %cst_10 {dimension_numbers = #tpu.dot_dimension_numbers<[1], [0], [0], [1], [0, 0, 1, 1], [], []>} : vector<8x128xbf16>, vector<128x512xbf16>, vector<8x512xf32> -> vector<8x512xf32>
    %13 = arith.maximumf %7, %12 : vector<8x512xf32>
    %c0_11 = arith.constant 0 : index
    %c160 = arith.constant 160 : index
    %14 = vector.load %arg1[%c0_11, %c160] : memref<8x352xbf16, #tpu.memory_space<vmem>>, vector<8x128xbf16>
    %cst_12 = arith.constant dense<0.000000e+00> : vector<8x512xf32>
    %15 = tpu.matmul %14, %0, %cst_12 {dimension_numbers = #tpu.dot_dimension_numbers<[1], [0], [0], [1], [0, 0, 1, 1], [], []>} : vector<8x128xbf16>, vector<128x512xbf16>, vector<8x512xf32> -> vector<8x512xf32>
    %16 = tpu.iota {dimensions = array<i32: 1>} : vector<8x512xi32>
    %c384_i32 = arith.constant 384 : i32
    %17 = vector.broadcast %c384_i32 : i32 to vector<8x512xi32>
    %18 = arith.cmpi slt, %16, %17 : vector<8x512xi32>
    %cst_13 = arith.constant 0xFF800000 : f32
    %19 = vector.broadcast %cst_13 : f32 to vector<8x512xf32>
    %20 = arith.select %18, %15, %19 : vector<8x512xi1>, vector<8x512xf32>
    %21 = arith.maximumf %10, %20 : vector<8x512xf32>
    %c0_14 = arith.constant 0 : index
    %c192 = arith.constant 192 : index
    %22 = vector.load %arg1[%c0_14, %c192] : memref<8x352xbf16, #tpu.memory_space<vmem>>, vector<8x128xbf16>
    %cst_15 = arith.constant dense<0.000000e+00> : vector<8x512xf32>
    %23 = tpu.matmul %22, %0, %cst_15 {dimension_numbers = #tpu.dot_dimension_numbers<[1], [0], [0], [1], [0, 0, 1, 1], [], []>} : vector<8x128xbf16>, vector<128x512xbf16>, vector<8x512xf32> -> vector<8x512xf32>
    %c256_i32 = arith.constant 256 : i32
    %24 = vector.broadcast %c256_i32 : i32 to vector<8x512xi32>
    %25 = arith.cmpi slt, %16, %24 : vector<8x512xi32>
    %cst_16 = arith.constant 0xFF800000 : f32
    %26 = vector.broadcast %cst_16 : f32 to vector<8x512xf32>
    %27 = arith.select %25, %23, %26 : vector<8x512xi1>, vector<8x512xf32>
    %28 = arith.maximumf %13, %27 : vector<8x512xf32>
    %c0_17 = arith.constant 0 : index
    %c224 = arith.constant 224 : index
    %29 = vector.load %arg1[%c0_17, %c224] : memref<8x352xbf16, #tpu.memory_space<vmem>>, vector<8x128xbf16>
    %cst_18 = arith.constant dense<0.000000e+00> : vector<8x512xf32>
    %30 = tpu.matmul %29, %0, %cst_18 {dimension_numbers = #tpu.dot_dimension_numbers<[1], [0], [0], [1], [0, 0, 1, 1], [], []>} : vector<8x128xbf16>, vector<128x512xbf16>, vector<8x512xf32> -> vector<8x512xf32>
    %c128_i32 = arith.constant 128 : i32
    %31 = vector.broadcast %c128_i32 : i32 to vector<8x512xi32>
    %32 = arith.cmpi slt, %16, %31 : vector<8x512xi32>
    %cst_19 = arith.constant 0xFF800000 : f32
    %33 = vector.broadcast %cst_19 : f32 to vector<8x512xf32>
    %34 = arith.select %32, %30, %33 : vector<8x512xi1>, vector<8x512xf32>
    %35 = arith.maximumf %21, %34 : vector<8x512xf32>
    %36 = arith.maximumf %28, %35 : vector<8x512xf32>
    %c0_20 = arith.constant 0 : index
    %c0_21 = arith.constant 0 : index
    %37 = vector.load %arg3[%c0_20, %c0_21] : memref<1x512xf32, #tpu.memory_space<vmem>>, vector<1x512xf32>
    %38 = vector.broadcast %37 : vector<1x512xf32> to vector<8x512xf32>
    %39 = arith.addf %36, %38 : vector<8x512xf32>
    %cst_22 = arith.constant 0.000000e+00 : f32
    %40 = vector.broadcast %cst_22 : f32 to vector<8x512xf32>
    %41 = arith.maximumf %39, %40 : vector<8x512xf32>
    %42 = arith.truncf %41 : vector<8x512xf32> to vector<8x512xbf16>
    %c0_23 = arith.constant 0 : index
    %c0_24 = arith.constant 0 : index
    %43 = vector.load %arg4[%c0_23, %c0_24] : memref<512x128xbf16, #tpu.memory_space<vmem>>, vector<512x128xbf16>
    %cst_25 = arith.constant dense<0.000000e+00> : vector<8x128xf32>
    %44 = tpu.matmul %42, %43, %cst_25 {dimension_numbers = #tpu.dot_dimension_numbers<[1], [0], [0], [1], [0, 0, 1, 1], [], []>} : vector<8x512xbf16>, vector<512x128xbf16>, vector<8x128xf32> -> vector<8x128xf32>
    %c0_26 = arith.constant 0 : index
    %c0_27 = arith.constant 0 : index
    %45 = vector.load %arg5[%c0_26, %c0_27] : memref<1x128xf32, #tpu.memory_space<vmem>>, vector<1x128xf32>
    %46 = vector.broadcast %45 : vector<1x128xf32> to vector<8x128xf32>
    %47 = arith.addf %44, %46 : vector<8x128xf32>
    %c0_28 = arith.constant 0 : index
    %c0_29 = arith.constant 0 : index
    %48 = vector.load %arg6[%c0_28, %c0_29] : memref<8x128xf32, #tpu.memory_space<vmem>>, vector<8x128xf32>
    tpu.vector_store %arg6[%c0_28, %c0_29], %47 {strides = array<i32>} : memref<8x128xf32, #tpu.memory_space<vmem>>, vector<8x128xf32>,
    return
  }
  func.func @transform_0(%arg0: i32) -> (i32, i32) {
    %c0_i32 = arith.constant 0 : i32
    %c0_i32_0 = arith.constant 0 : i32
    return %arg0, %c0_i32 : i32, i32
  }
  func.func @transform_1(%arg0: i32) -> (i32, i32) {
    %c0_i32 = arith.constant 0 : i32
    %c0_i32_0 = arith.constant 0 : i32
    %c0_i32_1 = arith.constant 0 : i32
    return %c0_i32, %c0_i32_0 : i32, i32
  }
  func.func @transform_2(%arg0: i32) -> (i32, i32) {
    %c0_i32 = arith.constant 0 : i32
    %c0_i32_0 = arith.constant 0 : i32
    %c0_i32_1 = arith.constant 0 : i32
    return %c0_i32, %c0_i32_0 : i32, i32
  }
  func.func @transform_3(%arg0: i32) -> (i32, i32) {
    %c0_i32 = arith.constant 0 : i32
    %c0_i32_0 = arith.constant 0 : i32
    %c0_i32_1 = arith.constant 0 : i32
    return %c0_i32, %c0_i32_0 : i32, i32
  }
  func.func @transform_4(%arg0: i32) -> (i32, i32) {
    %c0_i32 = arith.constant 0 : i32
    %c0_i32_0 = arith.constant 0 : i32
    %c0_i32_1 = arith.constant 0 : i32
    return %c0_i32, %c0_i32_0 : i32, i32
  }
  func.func @transform_5(%arg0: i32) -> (i32, i32) {
    %c0_i32 = arith.constant 0 : i32
    %c0_i32_0 = arith.constant 0 : i32
    return %arg0, %c0_i32 : i32, i32
  }
}

</mosaic_0001>

<llo_original>
// kernel: _lambda_.1
$region0: #{_lambda_.1}
  #allocation0 [shape = 'u32[]', space=smem, size = 0x4, offset = 0x4, fixed_abs, tag = 'smem constant byte address 0x4 - core index']
  #allocation1 [shape = 'u32[72,128]{1,0:T(1,128)}', space=vmem, size = 0x9000, scoped, tag = 'internal scratch']
  %s0 = inlined_call_operand.vmem [shape: bf16[8,352], index: 0, kind: input, shape index: {}]
  %s1 = inlined_call_operand.hbm [shape: bf16[128,512], index: 1, kind: input, shape index: {}]
  %s2 = inlined_call_operand.vmem [shape: f32[1,512], index: 2, kind: input, shape index: {}]
  %s3 = inlined_call_operand.hbm [shape: bf16[512,128], index: 3, kind: input, shape index: {}]
  %s4 = inlined_call_operand.vmem [shape: f32[1,128], index: 4, kind: input, shape index: {}]
  %s5 = inlined_call_operand.vmem [shape: f32[8,128], index: 5, kind: output, shape index: {}]
  %s6 = sld [smem:[#allocation0]]
  $region38: #{_lambda_.1} parent=0
    _
  %s8 = ssub.s32 1, %s6
  %s9 = scalar_select 0, %s8, %s6
  $region1: #{_lambda_.1} parent=0
    #allocation2 [shape = 'u8[131072]{0}', space=vmem, size = 0x20000, scoped, tag = 'input window, operand 1, single buffered']
    #allocation3 [shape = 's32[1]{0}', space=sflag, size = 0x4, scoped, tag = 'scoped memory for _lambda_.1']
    #allocation4 [shape = 'u8[131072]{0}', space=vmem, size = 0x20000, scoped, tag = 'input window, operand 3, single buffered']
    #allocation5 [shape = 's32[1]{0}', space=sflag, size = 0x4, scoped, tag = 'scoped memory for _lambda_.1']
    %10 = vsyncpa [#allocation3], 0
    %11 = vsyncpa [#allocation5], 0
    // Predicated region
    $region2: #{_lambda_.1} parent=1 // pred_check
      _
    $region3: #{_lambda_.1} parent=1 // pred_check_branch
      %13 = sbr.rel (0) target = $region5
    $region4: #{_lambda_.1} parent=1 // pred_region
      _
    $region5: #{_lambda_.1} parent=1 // pred_fallthru
      _
    // Predicated region
    $region6: #{_lambda_.1} parent=1 // pred_check
      _
    $region7: #{_lambda_.1} parent=1 // pred_check_branch
      %15 = sbr.rel (0) target = $region9
    $region8: #{_lambda_.1} parent=1 // pred_region
      %17 = vsyncadd [#allocation3], 0
      %s18 = sshll.u32 %s1, 4
      %s19 = int_to_ptr.hbm [resolvable:$true] %s18
      %s20 = sshll.u32 [#allocation2], 4
      %s21 = int_to_ptr.vmem [resolvable:$true] %s20
      %26 = dma.hbm_to_vmem [thread:$0]  %s19, 4096, %s21, [#allocation3], 256, 256, 16
    $region9: #{_lambda_.1} parent=1 // pred_fallthru
      _
    // Predicated region
    $region10: #{_lambda_.1} parent=1 // pred_check
      _
    $region11: #{_lambda_.1} parent=1 // pred_check_branch
      %28 = sbr.rel (0) target = $region13
    $region12: #{_lambda_.1} parent=1 // pred_region
      _
    $region13: #{_lambda_.1} parent=1 // pred_fallthru
      _
    // Predicated region
    $region14: #{_lambda_.1} parent=1 // pred_check
      _
    $region15: #{_lambda_.1} parent=1 // pred_check_branch
      %30 = sbr.rel (0) target = $region17
    $region16: #{_lambda_.1} parent=1 // pred_region
      %32 = vsyncadd [#allocation5], 0
      %s33 = sshll.u32 %s3, 4
      %s34 = int_to_ptr.hbm [resolvable:$true] %s33
      %s35 = sshll.u32 [#allocation4], 4
      %s36 = int_to_ptr.vmem [resolvable:$true] %s35
      %41 = dma.hbm_to_vmem [thread:$0]  %s34, 4096, %s36, [#allocation5], 64, 64, 4
    $region17: #{_lambda_.1} parent=1 // pred_fallthru
      _
    // Predicated region
    $region18: #{_lambda_.1} parent=1 // pred_check
      _
    $region19: #{_lambda_.1} parent=1 // pred_check_branch
      %43 = sbr.rel (0) target = $region21
    $region20: #{_lambda_.1} parent=1 // pred_region
      _
    $region21: #{_lambda_.1} parent=1 // pred_fallthru
      _
    // Predicated region
    $region22: #{_lambda_.1} parent=1 // pred_check
      _
    $region23: #{_lambda_.1} parent=1 // pred_check_branch
      %45 = sbr.rel (0) target = $region25
    $region24: #{_lambda_.1} parent=1 // pred_region
      %47 = dma.done [#allocation3], 4096
    $region25: #{_lambda_.1} parent=1 // pred_fallthru
      _
    // Predicated region
    $region26: #{_lambda_.1} parent=1 // pred_check
      _
    $region27: #{_lambda_.1} parent=1 // pred_check_branch
      %49 = sbr.rel (0) target = $region29
    $region28: #{_lambda_.1} parent=1 // pred_region
      %51 = dma.done [#allocation5], 4096
    $region29: #{_lambda_.1} parent=1 // pred_fallthru
      _
    %v52 = vld [vmem:[#allocation2] sm:$0xff]
    %v53 = vld [vmem:[#allocation2 + $0x8] sm:$0xff]
    %v54 = vld [vmem:[#allocation2 + $0x10] sm:$0xff]
    %v55 = vld [vmem:[#allocation2 + $0x18] sm:$0xff]
    %v56 = vld [vmem:[#allocation2 + $0x20] sm:$0xff]
    %v57 = vld [vmem:[#allocation2 + $0x28] sm:$0xff]
    %v58 = vld [vmem:[#allocation2 + $0x30] sm:$0xff]
    %v59 = vld [vmem:[#allocation2 + $0x38] sm:$0xff]
    %v60 = vld [vmem:[#allocation2 + $0x40] sm:$0xff]
    %v61 = vld [vmem:[#allocation2 + $0x48] sm:$0xff]
    %v62 = vld [vmem:[#allocation2 + $0x50] sm:$0xff]
    %v63 = vld [vmem:[#allocation2 + $0x58] sm:$0xff]
    %v64 = vld [vmem:[#allocation2 + $0x60] sm:$0xff]
    %v65 = vld [vmem:[#allocation2 + $0x68] sm:$0xff]
    %v66 = vld [vmem:[#allocation2 + $0x70] sm:$0xff]
    %v67 = vld [vmem:[#allocation2 + $0x78] sm:$0xff]
    %v68 = vld [vmem:[#allocation2 + $0x80] sm:$0xff]
    %v69 = vld [vmem:[#allocation2 + $0x88] sm:$0xff]
    %v70 = vld [vmem:[#allocation2 + $0x90] sm:$0xff]
    %v71 = vld [vmem:[#allocation2 + $0x98] sm:$0xff]
    %v72 = vld [vmem:[#allocation2 + $0xa0] sm:$0xff]
    %v73 = vld [vmem:[#allocation2 + $0xa8] sm:$0xff]
    %v74 = vld [vmem:[#allocation2 + $0xb0] sm:$0xff]
    %v75 = vld [vmem:[#allocation2 + $0xb8] sm:$0xff]
    %v76 = vld [vmem:[#allocation2 + $0xc0] sm:$0xff]
    %v77 = vld [vmem:[#allocation2 + $0xc8] sm:$0xff]
    %v78 = vld [vmem:[#allocation2 + $0xd0] sm:$0xff]
    %v79 = vld [vmem:[#allocation2 + $0xd8] sm:$0xff]
    %v80 = vld [vmem:[#allocation2 + $0xe0] sm:$0xff]
    %v81 = vld [vmem:[#allocation2 + $0xe8] sm:$0xff]
    %v82 = vld [vmem:[#allocation2 + $0xf0] sm:$0xff]
    %v83 = vld [vmem:[#allocation2 + $0xf8] sm:$0xff]
    %v84 = vld [vmem:[%s0] sm:$0xf]
    %v117 = vunpack.c.l.b16 %v52
    %v118 = vunpack.c.h.b16 %v52
    %v119 = vunpack.c.l.b16 %v53
    %v120 = vunpack.c.h.b16 %v53
    %v121 = vunpack.c.l.b16 %v54
    %v122 = vunpack.c.h.b16 %v54
    %v123 = vunpack.c.l.b16 %v55
    %v124 = vunpack.c.h.b16 %v55
    %v125 = vunpack.c.l.b16 %v56
    %v126 = vunpack.c.h.b16 %v56
    %v127 = vunpack.c.l.b16 %v57
    %v128 = vunpack.c.h.b16 %v57
    %v129 = vunpack.c.l.b16 %v58
    %v130 = vunpack.c.h.b16 %v58
    %v131 = vunpack.c.l.b16 %v59
    %v132 = vunpack.c.h.b16 %v59
    %v133 = vunpack.c.l.b16 %v60
    %v134 = vunpack.c.h.b16 %v60
    %v135 = vunpack.c.l.b16 %v61
    %v136 = vunpack.c.h.b16 %v61
    %v137 = vunpack.c.l.b16 %v62
    %v138 = vunpack.c.h.b16 %v62
    %v139 = vunpack.c.l.b16 %v63
    %v140 = vunpack.c.h.b16 %v63
    %v141 = vunpack.c.l.b16 %v64
    %v142 = vunpack.c.h.b16 %v64
    %v143 = vunpack.c.l.b16 %v65
    %v144 = vunpack.c.h.b16 %v65
    %v145 = vunpack.c.l.b16 %v66
    %v146 = vunpack.c.h.b16 %v66
    %v147 = vunpack.c.l.b16 %v67
    %v148 = vunpack.c.h.b16 %v67
    %v149 = vunpack.c.l.b16 %v68
    %v150 = vunpack.c.h.b16 %v68
    %v151 = vunpack.c.l.b16 %v69
    %v152 = vunpack.c.h.b16 %v69
    %v153 = vunpack.c.l.b16 %v70
    %v154 = vunpack.c.h.b16 %v70
    %v155 = vunpack.c.l.b16 %v71
    %v156 = vunpack.c.h.b16 %v71
    %v157 = vunpack.c.l.b16 %v72
    %v158 = vunpack.c.h.b16 %v72
    %v159 = vunpack.c.l.b16 %v73
    %v160 = vunpack.c.h.b16 %v73
    %v161 = vunpack.c.l.b16 %v74
    %v162 = vunpack.c.h.b16 %v74
    %v163 = vunpack.c.l.b16 %v75
    %v164 = vunpack.c.h.b16 %v75
    %v165 = vunpack.c.l.b16 %v76
    %v166 = vunpack.c.h.b16 %v76
    %v167 = vunpack.c.l.b16 %v77
    %v168 = vunpack.c.h.b16 %v77
    %v169 = vunpack.c.l.b16 %v78
    %v170 = vunpack.c.h.b16 %v78
    %v171 = vunpack.c.l.b16 %v79
    %v172 = vunpack.c.h.b16 %v79
    %v173 = vunpack.c.l.b16 %v80
    %v174 = vunpack.c.h.b16 %v80
    %v175 = vunpack.c.l.b16 %v81
    %v176 = vunpack.c.h.b16 %v81
    %v177 = vunpack.c.l.b16 %v82
    %v178 = vunpack.c.h.b16 %v82
    %v179 = vunpack.c.l.b16 %v83
    %v180 = vunpack.c.h.b16 %v83
    %v181 = vpack.c.b16 %v121, %v117
    %v182 = vpack.c.b16 %v122, %v118
    %v183 = vpack.c.b16 %v123, %v119
    %v184 = vpack.c.b16 %v124, %v120
    %v185 = vpack.c.b16 %v129, %v125
    %v186 = vpack.c.b16 %v130, %v126
    %v187 = vpack.c.b16 %v131, %v127
    %v188 = vpack.c.b16 %v132, %v128
    %v189 = vpack.c.b16 %v137, %v133
    %v190 = vpack.c.b16 %v138, %v134
    %v191 = vpack.c.b16 %v139, %v135
    %v192 = vpack.c.b16 %v140, %v136
    %v193 = vpack.c.b16 %v145, %v141
    %v194 = vpack.c.b16 %v146, %v142
    %v195 = vpack.c.b16 %v147, %v143
    %v196 = vpack.c.b16 %v148, %v144
    %v197 = vpack.c.b16 %v153, %v149
    %v198 = vpack.c.b16 %v154, %v150
    %v199 = vpack.c.b16 %v155, %v151
    %v200 = vpack.c.b16 %v156, %v152
    %v201 = vpack.c.b16 %v161, %v157
    %v202 = vpack.c.b16 %v162, %v158
    %v203 = vpack.c.b16 %v163, %v159
    %v204 = vpack.c.b16 %v164, %v160
    %v205 = vpack.c.b16 %v169, %v165
    %v206 = vpack.c.b16 %v170, %v166
    %v207 = vpack.c.b16 %v171, %v167
    %v208 = vpack.c.b16 %v172, %v168
    %v209 = vpack.c.b16 %v177, %v173
    %v210 = vpack.c.b16 %v178, %v174
    %v211 = vpack.c.b16 %v179, %v175
    %v212 = vpack.c.b16 %v180, %v176
    %245 = vmatpush.bf16.msra.mxu0 %v209
    %246 = vmatpush.bf16.msra.mxu0 %v205
    %247 = vmatpush.bf16.msra.mxu0 %v201
    %248 = vmatpush.bf16.msra.mxu0 %v197
    %249 = vmatpush.bf16.msra.mxu0 %v193
    %250 = vmatpush.bf16.msra.mxu0 %v189
    %251 = vmatpush.bf16.msra.mxu0 %v185
    %252 = vmatpush.bf16.msra.mxu0 %v181
    %253 = vmatmul.bf16.gmra.mxu0 %v84
    %v254 = vpop.f32.mrf.mxu0
    %v255 = vadd.f32 0.0, %v254
    %v256 = vpop.f32.mrf.mxu0
    %257 = vdwg.mxu0
    %258 = vmatpush.bf16.msra.mxu0 %v210
    %259 = vmatpush.bf16.msra.mxu0 %v206
    %260 = vmatpush.bf16.msra.mxu0 %v202
    %261 = vmatpush.bf16.msra.mxu0 %v198
    %262 = vmatpush.bf16.msra.mxu0 %v194
    %263 = vmatpush.bf16.msra.mxu0 %v190
    %264 = vmatpush.bf16.msra.mxu0 %v186
    %265 = vmatpush.bf16.msra.mxu0 %v182
    %266 = vmatmul.bf16.gmra.mxu0 %v84
    %v267 = vpop.f32.mrf.mxu0
    %v268 = vadd.f32 0.0, %v267
    %v269 = vpop.f32.mrf.mxu0
    %270 = vdwg.mxu0
    %271 = vmatpush.bf16.msra.mxu0 %v211
    %272 = vmatpush.bf16.msra.mxu0 %v207
    %273 = vmatpush.bf16.msra.mxu0 %v203
    %274 = vmatpush.bf16.msra.mxu0 %v199
    %275 = vmatpush.bf16.msra.mxu0 %v195
    %276 = vmatpush.bf16.msra.mxu0 %v191
    %277 = vmatpush.bf16.msra.mxu0 %v187
    %278 = vmatpush.bf16.msra.mxu0 %v183
    %279 = vmatmul.bf16.gmra.mxu0 %v84
    %v280 = vpop.f32.mrf.mxu0
    %v281 = vadd.f32 0.0, %v280
    %v282 = vpop.f32.mrf.mxu0
    %283 = vdwg.mxu0
    %284 = vmatpush.bf16.msra.mxu0 %v212
    %285 = vmatpush.bf16.msra.mxu0 %v208
    %286 = vmatpush.bf16.msra.mxu0 %v204
    %287 = vmatpush.bf16.msra.mxu0 %v200
    %288 = vmatpush.bf16.msra.mxu0 %v196
    %289 = vmatpush.bf16.msra.mxu0 %v192
    %290 = vmatpush.bf16.msra.mxu0 %v188
    %291 = vmatpush.bf16.msra.mxu0 %v184
    %292 = vmatmul.bf16.gmra.mxu0 %v84
    %v293 = vpop.f32.mrf.mxu0
    %v294 = vadd.f32 0.0, %v293
    %v295 = vpop.f32.mrf.mxu0
    %296 = vdwg.mxu0
    %v297 = vld [vmem:[%s0] sm:$0xff]
    %v299 = vunpack.c.l.b16 %v297
    %v300 = vunpack.c.h.b16 %v297
    %v301 = vpack.c.b16 %v299, %v299
    %v302 = vpack.c.b16 %v300, %v300
    %303 = vrot.lane.b32.xlu0 %v301, 96
    %v304 = vpop.permute.xlu0 %303
    %305 = vrot.lane.b32.xlu0 %v302, 96
    %v306 = vpop.permute.xlu0 %305
    %vm307 = vcmask 785408
    %v308 = vsel %vm307, %v304, %v306
    %310 = vmatpush.bf16.msra.mxu0 %v209
    %311 = vmatpush.bf16.msra.mxu0 %v205
    %312 = vmatpush.bf16.msra.mxu0 %v201
    %313 = vmatpush.bf16.msra.mxu0 %v197
    %314 = vmatpush.bf16.msra.mxu0 %v193
    %315 = vmatpush.bf16.msra.mxu0 %v189
    %316 = vmatpush.bf16.msra.mxu0 %v185
    %317 = vmatpush.bf16.msra.mxu0 %v181
    %318 = vmatmul.bf16.gmra.mxu0 %v308
    %v319 = vpop.f32.mrf.mxu0
    %v320 = vadd.f32 0.0, %v319
    %v321 = vpop.f32.mrf.mxu0
    %322 = vdwg.mxu0
    %323 = vmatpush.bf16.msra.mxu0 %v210
    %324 = vmatpush.bf16.msra.mxu0 %v206
    %325 = vmatpush.bf16.msra.mxu0 %v202
    %326 = vmatpush.bf16.msra.mxu0 %v198
    %327 = vmatpush.bf16.msra.mxu0 %v194
    %328 = vmatpush.bf16.msra.mxu0 %v190
    %329 = vmatpush.bf16.msra.mxu0 %v186
    %330 = vmatpush.bf16.msra.mxu0 %v182
    %331 = vmatmul.bf16.gmra.mxu0 %v308
    %v332 = vpop.f32.mrf.mxu0
    %v333 = vadd.f32 0.0, %v332
    %v334 = vpop.f32.mrf.mxu0
    %335 = vdwg.mxu0
    %336 = vmatpush.bf16.msra.mxu0 %v211
    %337 = vmatpush.bf16.msra.mxu0 %v207
    %338 = vmatpush.bf16.msra.mxu0 %v203
    %339 = vmatpush.bf16.msra.mxu0 %v199
    %340 = vmatpush.bf16.msra.mxu0 %v195
    %341 = vmatpush.bf16.msra.mxu0 %v191
    %342 = vmatpush.bf16.msra.mxu0 %v187
    %343 = vmatpush.bf16.msra.mxu0 %v183
    %344 = vmatmul.bf16.gmra.mxu0 %v308
    %v345 = vpop.f32.mrf.mxu0
    %v346 = vadd.f32 0.0, %v345
    %v347 = vpop.f32.mrf.mxu0
    %348 = vdwg.mxu0
    %349 = vmatpush.bf16.msra.mxu0 %v212
    %350 = vmatpush.bf16.msra.mxu0 %v208
    %351 = vmatpush.bf16.msra.mxu0 %v204
    %352 = vmatpush.bf16.msra.mxu0 %v200
    %353 = vmatpush.bf16.msra.mxu0 %v196
    %354 = vmatpush.bf16.msra.mxu0 %v192
    %355 = vmatpush.bf16.msra.mxu0 %v188
    %356 = vmatpush.bf16.msra.mxu0 %v184
    %357 = vmatmul.bf16.gmra.mxu0 %v308
    %v358 = vpop.f32.mrf.mxu0
    %v359 = vadd.f32 0.0, %v358
    %v360 = vpop.f32.mrf.mxu0
    %361 = vdwg.mxu0
    %362 = vrot.lane.b32.xlu0 %v301, 64
    %v363 = vpop.permute.xlu0 %362
    %364 = vrot.lane.b32.xlu0 %v302, 64
    %v365 = vpop.permute.xlu0 %364
    %vm366 = vcmask 523264
    %v367 = vsel %vm366, %v363, %v365
    %369 = vmatpush.bf16.msra.mxu0 %v209
    %370 = vmatpush.bf16.msra.mxu0 %v205
    %371 = vmatpush.bf16.msra.mxu0 %v201
    %372 = vmatpush.bf16.msra.mxu0 %v197
    %373 = vmatpush.bf16.msra.mxu0 %v193
    %374 = vmatpush.bf16.msra.mxu0 %v189
    %375 = vmatpush.bf16.msra.mxu0 %v185
    %376 = vmatpush.bf16.msra.mxu0 %v181
    %377 = vmatmul.bf16.gmra.mxu0 %v367
    %v378 = vpop.f32.mrf.mxu0
    %v379 = vadd.f32 0.0, %v378
    %v380 = vpop.f32.mrf.mxu0
    %381 = vdwg.mxu0
    %382 = vmatpush.bf16.msra.mxu0 %v210
    %383 = vmatpush.bf16.msra.mxu0 %v206
    %384 = vmatpush.bf16.msra.mxu0 %v202
    %385 = vmatpush.bf16.msra.mxu0 %v198
    %386 = vmatpush.bf16.msra.mxu0 %v194
    %387 = vmatpush.bf16.msra.mxu0 %v190
    %388 = vmatpush.bf16.msra.mxu0 %v186
    %389 = vmatpush.bf16.msra.mxu0 %v182
    %390 = vmatmul.bf16.gmra.mxu0 %v367
    %v391 = vpop.f32.mrf.mxu0
    %v392 = vadd.f32 0.0, %v391
    %v393 = vpop.f32.mrf.mxu0
    %394 = vdwg.mxu0
    %395 = vmatpush.bf16.msra.mxu0 %v211
    %396 = vmatpush.bf16.msra.mxu0 %v207
    %397 = vmatpush.bf16.msra.mxu0 %v203
    %398 = vmatpush.bf16.msra.mxu0 %v199
    %399 = vmatpush.bf16.msra.mxu0 %v195
    %400 = vmatpush.bf16.msra.mxu0 %v191
    %401 = vmatpush.bf16.msra.mxu0 %v187
    %402 = vmatpush.bf16.msra.mxu0 %v183
    %403 = vmatmul.bf16.gmra.mxu0 %v367
    %v404 = vpop.f32.mrf.mxu0
    %v405 = vadd.f32 0.0, %v404
    %v406 = vpop.f32.mrf.mxu0
    %407 = vdwg.mxu0
    %408 = vmatpush.bf16.msra.mxu0 %v212
    %409 = vmatpush.bf16.msra.mxu0 %v208
    %410 = vmatpush.bf16.msra.mxu0 %v204
    %411 = vmatpush.bf16.msra.mxu0 %v200
    %412 = vmatpush.bf16.msra.mxu0 %v196
    %413 = vmatpush.bf16.msra.mxu0 %v192
    %414 = vmatpush.bf16.msra.mxu0 %v188
    %415 = vmatpush.bf16.msra.mxu0 %v184
    %416 = vmatmul.bf16.gmra.mxu0 %v367
    %v417 = vpop.f32.mrf.mxu0
    %v418 = vadd.f32 0.0, %v417
    %v419 = vpop.f32.mrf.mxu0
    %420 = vdwg.mxu0
    %v421 = vmax.f32 %v255, %v379
    %v422 = vmax.f32 %v268, %v392
    %v423 = vmax.f32 %v281, %v405
    %v424 = vmax.f32 %v294, %v418
    %425 = vrot.lane.b32.xlu0 %v301, 32
    %v426 = vpop.permute.xlu0 %425
    %427 = vrot.lane.b32.xlu0 %v302, 32
    %v428 = vpop.permute.xlu0 %427
    %vm429 = vcmask 261120
    %v430 = vsel %vm429, %v426, %v428
    %432 = vmatpush.bf16.msra.mxu0 %v209
    %433 = vmatpush.bf16.msra.mxu0 %v205
    %434 = vmatpush.bf16.msra.mxu0 %v201
    %435 = vmatpush.bf16.msra.mxu0 %v197
    %436 = vmatpush.bf16.msra.mxu0 %v193
    %437 = vmatpush.bf16.msra.mxu0 %v189
    %438 = vmatpush.bf16.msra.mxu0 %v185
    %439 = vmatpush.bf16.msra.mxu0 %v181
    %440 = vmatmul.bf16.gmra.mxu0 %v430
    %v441 = vpop.f32.mrf.mxu0
    %v442 = vadd.f32 0.0, %v441
    %v443 = vpop.f32.mrf.mxu0
    %444 = vdwg.mxu0
    %445 = vmatpush.bf16.msra.mxu0 %v210
    %446 = vmatpush.bf16.msra.mxu0 %v206
    %447 = vmatpush.bf16.msra.mxu0 %v202
    %448 = vmatpush.bf16.msra.mxu0 %v198
    %449 = vmatpush.bf16.msra.mxu0 %v194
    %450 = vmatpush.bf16.msra.mxu0 %v190
    %451 = vmatpush.bf16.msra.mxu0 %v186
    %452 = vmatpush.bf16.msra.mxu0 %v182
    %453 = vmatmul.bf16.gmra.mxu0 %v430
    %v454 = vpop.f32.mrf.mxu0
    %v455 = vadd.f32 0.0, %v454
    %v456 = vpop.f32.mrf.mxu0
    %457 = vdwg.mxu0
    %458 = vmatpush.bf16.msra.mxu0 %v211
    %459 = vmatpush.bf16.msra.mxu0 %v207
    %460 = vmatpush.bf16.msra.mxu0 %v203
    %461 = vmatpush.bf16.msra.mxu0 %v199
    %462 = vmatpush.bf16.msra.mxu0 %v195
    %463 = vmatpush.bf16.msra.mxu0 %v191
    %464 = vmatpush.bf16.msra.mxu0 %v187
    %465 = vmatpush.bf16.msra.mxu0 %v183
    %466 = vmatmul.bf16.gmra.mxu0 %v430
    %v467 = vpop.f32.mrf.mxu0
    %v468 = vadd.f32 0.0, %v467
    %v469 = vpop.f32.mrf.mxu0
    %470 = vdwg.mxu0
    %471 = vmatpush.bf16.msra.mxu0 %v212
    %472 = vmatpush.bf16.msra.mxu0 %v208
    %473 = vmatpush.bf16.msra.mxu0 %v204
    %474 = vmatpush.bf16.msra.mxu0 %v200
    %475 = vmatpush.bf16.msra.mxu0 %v196
    %476 = vmatpush.bf16.msra.mxu0 %v192
    %477 = vmatpush.bf16.msra.mxu0 %v188
    %478 = vmatpush.bf16.msra.mxu0 %v184
    %479 = vmatmul.bf16.gmra.mxu0 %v430
    %v480 = vpop.f32.mrf.mxu0
    %v481 = vadd.f32 0.0, %v480
    %v482 = vpop.f32.mrf.mxu0
    %483 = vdwg.mxu0
    %v484 = vmax.f32 %v320, %v442
    %v485 = vmax.f32 %v333, %v455
    %v486 = vmax.f32 %v346, %v468
    %v487 = vmax.f32 %v359, %v481
    %v488 = vld [vmem:[%s0 + $0x4] sm:$0xf]
    %489 = vmatpush.bf16.msra.mxu0 %v209
    %490 = vmatpush.bf16.msra.mxu0 %v205
    %491 = vmatpush.bf16.msra.mxu0 %v201
    %492 = vmatpush.bf16.msra.mxu0 %v197
    %493 = vmatpush.bf16.msra.mxu0 %v193
    %494 = vmatpush.bf16.msra.mxu0 %v189
    %495 = vmatpush.bf16.msra.mxu0 %v185
    %496 = vmatpush.bf16.msra.mxu0 %v181
    %497 = vmatmul.bf16.gmra.mxu0 %v488
    %v498 = vpop.f32.mrf.mxu0
    %v499 = vadd.f32 0.0, %v498
    %v500 = vpop.f32.mrf.mxu0
    %501 = vdwg.mxu0
    %502 = vmatpush.bf16.msra.mxu0 %v210
    %503 = vmatpush.bf16.msra.mxu0 %v206
    %504 = vmatpush.bf16.msra.mxu0 %v202
    %505 = vmatpush.bf16.msra.mxu0 %v198
    %506 = vmatpush.bf16.msra.mxu0 %v194
    %507 = vmatpush.bf16.msra.mxu0 %v190
    %508 = vmatpush.bf16.msra.mxu0 %v186
    %509 = vmatpush.bf16.msra.mxu0 %v182
    %510 = vmatmul.bf16.gmra.mxu0 %v488
    %v511 = vpop.f32.mrf.mxu0
    %v512 = vadd.f32 0.0, %v511
    %v513 = vpop.f32.mrf.mxu0
    %514 = vdwg.mxu0
    %515 = vmatpush.bf16.msra.mxu0 %v211
    %516 = vmatpush.bf16.msra.mxu0 %v207
    %517 = vmatpush.bf16.msra.mxu0 %v203
    %518 = vmatpush.bf16.msra.mxu0 %v199
    %519 = vmatpush.bf16.msra.mxu0 %v195
    %520 = vmatpush.bf16.msra.mxu0 %v191
    %521 = vmatpush.bf16.msra.mxu0 %v187
    %522 = vmatpush.bf16.msra.mxu0 %v183
    %523 = vmatmul.bf16.gmra.mxu0 %v488
    %v524 = vpop.f32.mrf.mxu0
    %v525 = vadd.f32 0.0, %v524
    %v526 = vpop.f32.mrf.mxu0
    %527 = vdwg.mxu0
    %528 = vmatpush.bf16.msra.mxu0 %v212
    %529 = vmatpush.bf16.msra.mxu0 %v208
    %530 = vmatpush.bf16.msra.mxu0 %v204
    %531 = vmatpush.bf16.msra.mxu0 %v200
    %532 = vmatpush.bf16.msra.mxu0 %v196
    %533 = vmatpush.bf16.msra.mxu0 %v192
    %534 = vmatpush.bf16.msra.mxu0 %v188
    %535 = vmatpush.bf16.msra.mxu0 %v184
    %536 = vmatmul.bf16.gmra.mxu0 %v488
    %v537 = vpop.f32.mrf.mxu0
    %v538 = vadd.f32 0.0, %v537
    %v539 = vpop.f32.mrf.mxu0
    %540 = vdwg.mxu0
    %v541 = vmax.f32 %v421, %v499
    %v542 = vmax.f32 %v422, %v512
    %v543 = vmax.f32 %v423, %v525
    %v544 = vmax.f32 %v424, %v538
    %v545 = vld [vmem:[%s0 + $0x4] sm:$0xff]
    %v547 = vunpack.c.l.b16 %v545
    %v548 = vunpack.c.h.b16 %v545
    %v549 = vpack.c.b16 %v547, %v547
    %v550 = vpack.c.b16 %v548, %v548
    %551 = vrot.lane.b32.xlu0 %v549, 96
    %v552 = vpop.permute.xlu0 %551
    %553 = vrot.lane.b32.xlu0 %v550, 96
    %v554 = vpop.permute.xlu0 %553
    %v555 = vsel %vm307, %v552, %v554
    %557 = vmatpush.bf16.msra.mxu0 %v209
    %558 = vmatpush.bf16.msra.mxu0 %v205
    %559 = vmatpush.bf16.msra.mxu0 %v201
    %560 = vmatpush.bf16.msra.mxu0 %v197
    %561 = vmatpush.bf16.msra.mxu0 %v193
    %562 = vmatpush.bf16.msra.mxu0 %v189
    %563 = vmatpush.bf16.msra.mxu0 %v185
    %564 = vmatpush.bf16.msra.mxu0 %v181
    %565 = vmatmul.bf16.gmra.mxu0 %v555
    %v566 = vpop.f32.mrf.mxu0
    %v567 = vadd.f32 0.0, %v566
    %v568 = vpop.f32.mrf.mxu0
    %569 = vdwg.mxu0
    %570 = vmatpush.bf16.msra.mxu0 %v210
    %571 = vmatpush.bf16.msra.mxu0 %v206
    %572 = vmatpush.bf16.msra.mxu0 %v202
    %573 = vmatpush.bf16.msra.mxu0 %v198
    %574 = vmatpush.bf16.msra.mxu0 %v194
    %575 = vmatpush.bf16.msra.mxu0 %v190
    %576 = vmatpush.bf16.msra.mxu0 %v186
    %577 = vmatpush.bf16.msra.mxu0 %v182
    %578 = vmatmul.bf16.gmra.mxu0 %v555
    %v579 = vpop.f32.mrf.mxu0
    %v580 = vadd.f32 0.0, %v579
    %v581 = vpop.f32.mrf.mxu0
    %582 = vdwg.mxu0
    %583 = vmatpush.bf16.msra.mxu0 %v211
    %584 = vmatpush.bf16.msra.mxu0 %v207
    %585 = vmatpush.bf16.msra.mxu0 %v203
    %586 = vmatpush.bf16.msra.mxu0 %v199
    %587 = vmatpush.bf16.msra.mxu0 %v195
    %588 = vmatpush.bf16.msra.mxu0 %v191
    %589 = vmatpush.bf16.msra.mxu0 %v187
    %590 = vmatpush.bf16.msra.mxu0 %v183
    %591 = vmatmul.bf16.gmra.mxu0 %v555
    %v592 = vpop.f32.mrf.mxu0
    %v593 = vadd.f32 0.0, %v592
    %v594 = vpop.f32.mrf.mxu0
    %595 = vdwg.mxu0
    %596 = vmatpush.bf16.msra.mxu0 %v212
    %597 = vmatpush.bf16.msra.mxu0 %v208
    %598 = vmatpush.bf16.msra.mxu0 %v204
    %599 = vmatpush.bf16.msra.mxu0 %v200
    %600 = vmatpush.bf16.msra.mxu0 %v196
    %601 = vmatpush.bf16.msra.mxu0 %v192
    %602 = vmatpush.bf16.msra.mxu0 %v188
    %603 = vmatpush.bf16.msra.mxu0 %v184
    %604 = vmatmul.bf16.gmra.mxu0 %v555
    %v605 = vpop.f32.mrf.mxu0
    %v606 = vadd.f32 0.0, %v605
    %v607 = vpop.f32.mrf.mxu0
    %608 = vdwg.mxu0
    %v609 = vlaneseq
    %v610 = vand.u32 %v609, 127
    %v611 = vadd.s32 %v610, 128
    %v612 = vadd.s32 %v610, 256
    %v613 = vadd.s32 %v610, 384
    %vm614 = vcmp.lt.s32.totalorder %v610, 384
    %vm615 = vcmp.lt.s32.totalorder %v611, 384
    %vm616 = vcmp.lt.s32.totalorder %v612, 384
    %vm617 = vcmp.lt.s32.totalorder %v613, 384
    %v618 = vsel %vm614, %v567, -inf
    %v619 = vsel %vm615, %v580, -inf
    %v620 = vsel %vm616, %v593, -inf
    %v621 = vsel %vm617, %v606, -inf
    %v622 = vmax.f32 %v484, %v618
    %v623 = vmax.f32 %v485, %v619
    %v624 = vmax.f32 %v486, %v620
    %v625 = vmax.f32 %v487, %v621
    %626 = vrot.lane.b32.xlu0 %v549, 64
    %v627 = vpop.permute.xlu0 %626
    %628 = vrot.lane.b32.xlu0 %v550, 64
    %v629 = vpop.permute.xlu0 %628
    %v630 = vsel %vm366, %v627, %v629
    %632 = vmatpush.bf16.msra.mxu0 %v209
    %633 = vmatpush.bf16.msra.mxu0 %v205
    %634 = vmatpush.bf16.msra.mxu0 %v201
    %635 = vmatpush.bf16.msra.mxu0 %v197
    %636 = vmatpush.bf16.msra.mxu0 %v193
    %637 = vmatpush.bf16.msra.mxu0 %v189
    %638 = vmatpush.bf16.msra.mxu0 %v185
    %639 = vmatpush.bf16.msra.mxu0 %v181
    %640 = vmatmul.bf16.gmra.mxu0 %v630
    %v641 = vpop.f32.mrf.mxu0
    %v642 = vadd.f32 0.0, %v641
    %v643 = vpop.f32.mrf.mxu0
    %644 = vdwg.mxu0
    %645 = vmatpush.bf16.msra.mxu0 %v210
    %646 = vmatpush.bf16.msra.mxu0 %v206
    %647 = vmatpush.bf16.msra.mxu0 %v202
    %648 = vmatpush.bf16.msra.mxu0 %v198
    %649 = vmatpush.bf16.msra.mxu0 %v194
    %650 = vmatpush.bf16.msra.mxu0 %v190
    %651 = vmatpush.bf16.msra.mxu0 %v186
    %652 = vmatpush.bf16.msra.mxu0 %v182
    %653 = vmatmul.bf16.gmra.mxu0 %v630
    %v654 = vpop.f32.mrf.mxu0
    %v655 = vadd.f32 0.0, %v654
    %v656 = vpop.f32.mrf.mxu0
    %657 = vdwg.mxu0
    %658 = vmatpush.bf16.msra.mxu0 %v211
    %659 = vmatpush.bf16.msra.mxu0 %v207
    %660 = vmatpush.bf16.msra.mxu0 %v203
    %661 = vmatpush.bf16.msra.mxu0 %v199
    %662 = vmatpush.bf16.msra.mxu0 %v195
    %663 = vmatpush.bf16.msra.mxu0 %v191
    %664 = vmatpush.bf16.msra.mxu0 %v187
    %665 = vmatpush.bf16.msra.mxu0 %v183
    %666 = vmatmul.bf16.gmra.mxu0 %v630
    %v667 = vpop.f32.mrf.mxu0
    %v668 = vadd.f32 0.0, %v667
    %v669 = vpop.f32.mrf.mxu0
    %670 = vdwg.mxu0
    %671 = vmatpush.bf16.msra.mxu0 %v212
    %672 = vmatpush.bf16.msra.mxu0 %v208
    %673 = vmatpush.bf16.msra.mxu0 %v204
    %674 = vmatpush.bf16.msra.mxu0 %v200
    %675 = vmatpush.bf16.msra.mxu0 %v196
    %676 = vmatpush.bf16.msra.mxu0 %v192
    %677 = vmatpush.bf16.msra.mxu0 %v188
    %678 = vmatpush.bf16.msra.mxu0 %v184
    %679 = vmatmul.bf16.gmra.mxu0 %v630
    %v680 = vpop.f32.mrf.mxu0
    %v681 = vadd.f32 0.0, %v680
    %v682 = vpop.f32.mrf.mxu0
    %683 = vdwg.mxu0
    %vm684 = vcmp.lt.s32.totalorder %v610, 256
    %vm685 = vcmp.lt.s32.totalorder %v611, 256
    %vm686 = vcmp.lt.s32.totalorder %v612, 256
    %vm687 = vcmp.lt.s32.totalorder %v613, 256
    %v688 = vsel %vm684, %v642, -inf
    %v689 = vsel %vm685, %v655, -inf
    %v690 = vsel %vm686, %v668, -inf
    %v691 = vsel %vm687, %v681, -inf
    %v692 = vmax.f32 %v541, %v688
    %v693 = vmax.f32 %v542, %v689
    %v694 = vmax.f32 %v543, %v690
    %v695 = vmax.f32 %v544, %v691
    %696 = vrot.lane.b32.xlu0 %v549, 32
    %v697 = vpop.permute.xlu0 %696
    %698 = vrot.lane.b32.xlu0 %v550, 32
    %v699 = vpop.permute.xlu0 %698
    %v700 = vsel %vm429, %v697, %v699
    %702 = vmatpush.bf16.msra.mxu0 %v209
    %703 = vmatpush.bf16.msra.mxu0 %v205
    %704 = vmatpush.bf16.msra.mxu0 %v201
    %705 = vmatpush.bf16.msra.mxu0 %v197
    %706 = vmatpush.bf16.msra.mxu0 %v193
    %707 = vmatpush.bf16.msra.mxu0 %v189
    %708 = vmatpush.bf16.msra.mxu0 %v185
    %709 = vmatpush.bf16.msra.mxu0 %v181
    %710 = vmatmul.bf16.gmra.mxu0 %v700
    %v711 = vpop.f32.mrf.mxu0
    %v712 = vadd.f32 0.0, %v711
    %v713 = vpop.f32.mrf.mxu0
    %714 = vdwg.mxu0
    %715 = vmatpush.bf16.msra.mxu0 %v210
    %716 = vmatpush.bf16.msra.mxu0 %v206
    %717 = vmatpush.bf16.msra.mxu0 %v202
    %718 = vmatpush.bf16.msra.mxu0 %v198
    %719 = vmatpush.bf16.msra.mxu0 %v194
    %720 = vmatpush.bf16.msra.mxu0 %v190
    %721 = vmatpush.bf16.msra.mxu0 %v186
    %722 = vmatpush.bf16.msra.mxu0 %v182
    %723 = vmatmul.bf16.gmra.mxu0 %v700
    %v724 = vpop.f32.mrf.mxu0
    %v725 = vadd.f32 0.0, %v724
    %v726 = vpop.f32.mrf.mxu0
    %727 = vdwg.mxu0
    %728 = vmatpush.bf16.msra.mxu0 %v211
    %729 = vmatpush.bf16.msra.mxu0 %v207
    %730 = vmatpush.bf16.msra.mxu0 %v203
    %731 = vmatpush.bf16.msra.mxu0 %v199
    %732 = vmatpush.bf16.msra.mxu0 %v195
    %733 = vmatpush.bf16.msra.mxu0 %v191
    %734 = vmatpush.bf16.msra.mxu0 %v187
    %735 = vmatpush.bf16.msra.mxu0 %v183
    %736 = vmatmul.bf16.gmra.mxu0 %v700
    %v737 = vpop.f32.mrf.mxu0
    %v738 = vadd.f32 0.0, %v737
    %v739 = vpop.f32.mrf.mxu0
    %740 = vdwg.mxu0
    %741 = vmatpush.bf16.msra.mxu0 %v212
    %742 = vmatpush.bf16.msra.mxu0 %v208
    %743 = vmatpush.bf16.msra.mxu0 %v204
    %744 = vmatpush.bf16.msra.mxu0 %v200
    %745 = vmatpush.bf16.msra.mxu0 %v196
    %746 = vmatpush.bf16.msra.mxu0 %v192
    %747 = vmatpush.bf16.msra.mxu0 %v188
    %748 = vmatpush.bf16.msra.mxu0 %v184
    %749 = vmatmul.bf16.gmra.mxu0 %v700
    %v750 = vpop.f32.mrf.mxu0
    %v751 = vadd.f32 0.0, %v750
    %v752 = vpop.f32.mrf.mxu0
    %753 = vdwg.mxu0
    %vm754 = vcmp.lt.s32.totalorder %v610, 128
    %vm755 = vcmp.lt.s32.totalorder %v611, 128
    %vm756 = vcmp.lt.s32.totalorder %v612, 128
    %vm757 = vcmp.lt.s32.totalorder %v613, 128
    %v758 = vsel %vm754, %v712, -inf
    %v759 = vsel %vm755, %v725, -inf
    %v760 = vsel %vm756, %v738, -inf
    %v761 = vsel %vm757, %v751, -inf
    %v762 = vmax.f32 %v622, %v758
    %v763 = vmax.f32 %v623, %v759
    %v764 = vmax.f32 %v624, %v760
    %v765 = vmax.f32 %v625, %v761
    %v766 = vmax.f32 %v692, %v762
    %v767 = vmax.f32 %v693, %v763
    %v768 = vmax.f32 %v694, %v764
    %v769 = vmax.f32 %v695, %v765
    %v770 = vld [vmem:[%s2] sm:$0xf]
    %v772 = vperm.slane %v770, 0
    %v773 = vperm.slane %v770, 1
    %v774 = vperm.slane %v770, 2
    %v775 = vperm.slane %v770, 3
    %v780 = vadd.f32 %v766, %v772
    %v781 = vadd.f32 %v767, %v773
    %v782 = vadd.f32 %v768, %v774
    %v783 = vadd.f32 %v769, %v775
    %v784 = vmax.f32 %v780, 0.0
    %v785 = vmax.f32 %v781, 0.0
    %v786 = vmax.f32 %v782, 0.0
    %v787 = vmax.f32 %v783, 0.0
    %v788 = vpack.c.bf16 %v784, %v784
    %v789 = vpack.c.bf16 %v785, %v785
    %v790 = vpack.c.bf16 %v786, %v786
    %v791 = vpack.c.bf16 %v787, %v787
    %v792 = vld [vmem:[#allocation4] sm:$0xf]
    %v793 = vld [vmem:[#allocation4 + $0x4] sm:$0xf]
    %v794 = vld [vmem:[#allocation4 + $0x8] sm:$0xf]
    %v795 = vld [vmem:[#allocation4 + $0xc] sm:$0xf]
    %v796 = vld [vmem:[#allocation4 + $0x10] sm:$0xf]
    %v797 = vld [vmem:[#allocation4 + $0x14] sm:$0xf]
    %v798 = vld [vmem:[#allocation4 + $0x18] sm:$0xf]
    %v799 = vld [vmem:[#allocation4 + $0x1c] sm:$0xf]
    %v800 = vld [vmem:[#allocation4 + $0x20] sm:$0xf]
    %v801 = vld [vmem:[#allocation4 + $0x24] sm:$0xf]
    %v802 = vld [vmem:[#allocation4 + $0x28] sm:$0xf]
    %v803 = vld [vmem:[#allocation4 + $0x2c] sm:$0xf]
    %v804 = vld [vmem:[#allocation4 + $0x30] sm:$0xf]
    %v805 = vld [vmem:[#allocation4 + $0x34] sm:$0xf]
    %v806 = vld [vmem:[#allocation4 + $0x38] sm:$0xf]
    %v807 = vld [vmem:[#allocation4 + $0x3c] sm:$0xf]
    %v808 = vld [vmem:[#allocation4 + $0x40] sm:$0xf]
    %v809 = vld [vmem:[#allocation4 + $0x44] sm:$0xf]
    %v810 = vld [vmem:[#allocation4 + $0x48] sm:$0xf]
    %v811 = vld [vmem:[#allocation4 + $0x4c] sm:$0xf]
    %v812 = vld [vmem:[#allocation4 + $0x50] sm:$0xf]
    %v813 = vld [vmem:[#allocation4 + $0x54] sm:$0xf]
    %v814 = vld [vmem:[#allocation4 + $0x58] sm:$0xf]
    %v815 = vld [vmem:[#allocation4 + $0x5c] sm:$0xf]
    %v816 = vld [vmem:[#allocation4 + $0x60] sm:$0xf]
    %v817 = vld [vmem:[#allocation4 + $0x64] sm:$0xf]
    %v818 = vld [vmem:[#allocation4 + $0x68] sm:$0xf]
    %v819 = vld [vmem:[#allocation4 + $0x6c] sm:$0xf]
    %v820 = vld [vmem:[#allocation4 + $0x70] sm:$0xf]
    %v821 = vld [vmem:[#allocation4 + $0x74] sm:$0xf]
    %v822 = vld [vmem:[#allocation4 + $0x78] sm:$0xf]
    %v823 = vld [vmem:[#allocation4 + $0x7c] sm:$0xf]
    %v824 = vld [vmem:[#allocation4 + $0x80] sm:$0xf]
    %v825 = vld [vmem:[#allocation4 + $0x84] sm:$0xf]
    %v826 = vld [vmem:[#allocation4 + $0x88] sm:$0xf]
    %v827 = vld [vmem:[#allocation4 + $0x8c] sm:$0xf]
    %v828 = vld [vmem:[#allocation4 + $0x90] sm:$0xf]
    %v829 = vld [vmem:[#allocation4 + $0x94] sm:$0xf]
    %v830 = vld [vmem:[#allocation4 + $0x98] sm:$0xf]
    %v831 = vld [vmem:[#allocation4 + $0x9c] sm:$0xf]
    %v832 = vld [vmem:[#allocation4 + $0xa0] sm:$0xf]
    %v833 = vld [vmem:[#allocation4 + $0xa4] sm:$0xf]
    %v834 = vld [vmem:[#allocation4 + $0xa8] sm:$0xf]
    %v835 = vld [vmem:[#allocation4 + $0xac] sm:$0xf]
    %v836 = vld [vmem:[#allocation4 + $0xb0] sm:$0xf]
    %v837 = vld [vmem:[#allocation4 + $0xb4] sm:$0xf]
    %v838 = vld [vmem:[#allocation4 + $0xb8] sm:$0xf]
    %v839 = vld [vmem:[#allocation4 + $0xbc] sm:$0xf]
    %v840 = vld [vmem:[#allocation4 + $0xc0] sm:$0xf]
    %v841 = vld [vmem:[#allocation4 + $0xc4] sm:$0xf]
    %v842 = vld [vmem:[#allocation4 + $0xc8] sm:$0xf]
    %v843 = vld [vmem:[#allocation4 + $0xcc] sm:$0xf]
    %v844 = vld [vmem:[#allocation4 + $0xd0] sm:$0xf]
    %v845 = vld [vmem:[#allocation4 + $0xd4] sm:$0xf]
    %v846 = vld [vmem:[#allocation4 + $0xd8] sm:$0xf]
    %v847 = vld [vmem:[#allocation4 + $0xdc] sm:$0xf]
    %v848 = vld [vmem:[#allocation4 + $0xe0] sm:$0xf]
    %v849 = vld [vmem:[#allocation4 + $0xe4] sm:$0xf]
    %v850 = vld [vmem:[#allocation4 + $0xe8] sm:$0xf]
    %v851 = vld [vmem:[#allocation4 + $0xec] sm:$0xf]
    %v852 = vld [vmem:[#allocation4 + $0xf0] sm:$0xf]
    %v853 = vld [vmem:[#allocation4 + $0xf4] sm:$0xf]
    %v854 = vld [vmem:[#allocation4 + $0xf8] sm:$0xf]
    %v855 = vld [vmem:[#allocation4 + $0xfc] sm:$0xf]
    %v856 = vld [vmem:[%s4] sm:$0x1]
    %v858 = vperm.slane %v856, 0
    %v924 = vunpack.c.l.b16 %v792
    %v925 = vunpack.c.l.b16 %v793
    %v926 = vunpack.c.l.b16 %v794
    %v927 = vunpack.c.l.b16 %v795
    %v928 = vunpack.c.l.b16 %v796
    %v929 = vunpack.c.l.b16 %v797
    %v930 = vunpack.c.l.b16 %v798
    %v931 = vunpack.c.l.b16 %v799
    %v932 = vunpack.c.l.b16 %v800
    %v933 = vunpack.c.l.b16 %v801
    %v934 = vunpack.c.l.b16 %v802
    %v935 = vunpack.c.l.b16 %v803
    %v936 = vunpack.c.l.b16 %v804
    %v937 = vunpack.c.l.b16 %v805
    %v938 = vunpack.c.l.b16 %v806
    %v939 = vunpack.c.l.b16 %v807
    %v940 = vunpack.c.l.b16 %v808
    %v941 = vunpack.c.l.b16 %v809
    %v942 = vunpack.c.l.b16 %v810
    %v943 = vunpack.c.l.b16 %v811
    %v944 = vunpack.c.l.b16 %v812
    %v945 = vunpack.c.l.b16 %v813
    %v946 = vunpack.c.l.b16 %v814
    %v947 = vunpack.c.l.b16 %v815
    %v948 = vunpack.c.l.b16 %v816
    %v949 = vunpack.c.l.b16 %v817
    %v950 = vunpack.c.l.b16 %v818
    %v951 = vunpack.c.l.b16 %v819
    %v952 = vunpack.c.l.b16 %v820
    %v953 = vunpack.c.l.b16 %v821
    %v954 = vunpack.c.l.b16 %v822
    %v955 = vunpack.c.l.b16 %v823
    %v956 = vunpack.c.l.b16 %v824
    %v957 = vunpack.c.l.b16 %v825
    %v958 = vunpack.c.l.b16 %v826
    %v959 = vunpack.c.l.b16 %v827
    %v960 = vunpack.c.l.b16 %v828
    %v961 = vunpack.c.l.b16 %v829
    %v962 = vunpack.c.l.b16 %v830
    %v963 = vunpack.c.l.b16 %v831
    %v964 = vunpack.c.l.b16 %v832
    %v965 = vunpack.c.l.b16 %v833
    %v966 = vunpack.c.l.b16 %v834
    %v967 = vunpack.c.l.b16 %v835
    %v968 = vunpack.c.l.b16 %v836
    %v969 = vunpack.c.l.b16 %v837
    %v970 = vunpack.c.l.b16 %v838
    %v971 = vunpack.c.l.b16 %v839
    %v972 = vunpack.c.l.b16 %v840
    %v973 = vunpack.c.l.b16 %v841
    %v974 = vunpack.c.l.b16 %v842
    %v975 = vunpack.c.l.b16 %v843
    %v976 = vunpack.c.l.b16 %v844
    %v977 = vunpack.c.l.b16 %v845
    %v978 = vunpack.c.l.b16 %v846
    %v979 = vunpack.c.l.b16 %v847
    %v980 = vunpack.c.l.b16 %v848
    %v981 = vunpack.c.l.b16 %v849
    %v982 = vunpack.c.l.b16 %v850
    %v983 = vunpack.c.l.b16 %v851
    %v984 = vunpack.c.l.b16 %v852
    %v985 = vunpack.c.l.b16 %v853
    %v986 = vunpack.c.l.b16 %v854
    %v987 = vunpack.c.l.b16 %v855
    %v988 = vpack.c.b16 %v925, %v924
    %v989 = vpack.c.b16 %v927, %v926
    %v990 = vpack.c.b16 %v929, %v928
    %v991 = vpack.c.b16 %v931, %v930
    %v992 = vpack.c.b16 %v933, %v932
    %v993 = vpack.c.b16 %v935, %v934
    %v994 = vpack.c.b16 %v937, %v936
    %v995 = vpack.c.b16 %v939, %v938
    %v996 = vpack.c.b16 %v941, %v940
    %v997 = vpack.c.b16 %v943, %v942
    %v998 = vpack.c.b16 %v945, %v944
    %v999 = vpack.c.b16 %v947, %v946
    %v1000 = vpack.c.b16 %v949, %v948
    %v1001 = vpack.c.b16 %v951, %v950
    %v1002 = vpack.c.b16 %v953, %v952
    %v1003 = vpack.c.b16 %v955, %v954
    %v1004 = vpack.c.b16 %v957, %v956
    %v1005 = vpack.c.b16 %v959, %v958
    %v1006 = vpack.c.b16 %v961, %v960
    %v1007 = vpack.c.b16 %v963, %v962
    %v1008 = vpack.c.b16 %v965, %v964
    %v1009 = vpack.c.b16 %v967, %v966
    %v1010 = vpack.c.b16 %v969, %v968
    %v1011 = vpack.c.b16 %v971, %v970
    %v1012 = vpack.c.b16 %v973, %v972
    %v1013 = vpack.c.b16 %v975, %v974
    %v1014 = vpack.c.b16 %v977, %v976
    %v1015 = vpack.c.b16 %v979, %v978
    %v1016 = vpack.c.b16 %v981, %v980
    %v1017 = vpack.c.b16 %v983, %v982
    %v1018 = vpack.c.b16 %v985, %v984
    %v1019 = vpack.c.b16 %v987, %v986
    %1052 = vmatpush.bf16.msra.mxu0 %v995
    %1053 = vmatpush.bf16.msra.mxu0 %v994
    %1054 = vmatpush.bf16.msra.mxu0 %v993
    %1055 = vmatpush.bf16.msra.mxu0 %v992
    %1056 = vmatpush.bf16.msra.mxu0 %v991
    %1057 = vmatpush.bf16.msra.mxu0 %v990
    %1058 = vmatpush.bf16.msra.mxu0 %v989
    %1059 = vmatpush.bf16.msra.mxu0 %v988
    %1060 = vmatmul.bf16.gmra.mxu0 %v788
    %v1061 = vpop.f32.mrf.mxu0
    %v1062 = vadd.f32 %v858, %v1061
    %v1063 = vpop.f32.mrf.mxu0
    %1064 = vdwg.mxu0
    %1065 = vmatpush.bf16.msra.mxu0 %v1003
    %1066 = vmatpush.bf16.msra.mxu0 %v1002
    %1067 = vmatpush.bf16.msra.mxu0 %v1001
    %1068 = vmatpush.bf16.msra.mxu0 %v1000
    %1069 = vmatpush.bf16.msra.mxu0 %v999
    %1070 = vmatpush.bf16.msra.mxu0 %v998
    %1071 = vmatpush.bf16.msra.mxu0 %v997
    %1072 = vmatpush.bf16.msra.mxu0 %v996
    %1073 = vmatmul.bf16.gmra.mxu0 %v789
    %v1074 = vpop.f32.mrf.mxu0
    %v1075 = vadd.f32 %v1062, %v1074
    %v1076 = vpop.f32.mrf.mxu0
    %1077 = vdwg.mxu0
    %1078 = vmatpush.bf16.msra.mxu0 %v1011
    %1079 = vmatpush.bf16.msra.mxu0 %v1010
    %1080 = vmatpush.bf16.msra.mxu0 %v1009
    %1081 = vmatpush.bf16.msra.mxu0 %v1008
    %1082 = vmatpush.bf16.msra.mxu0 %v1007
    %1083 = vmatpush.bf16.msra.mxu0 %v1006
    %1084 = vmatpush.bf16.msra.mxu0 %v1005
    %1085 = vmatpush.bf16.msra.mxu0 %v1004
    %1086 = vmatmul.bf16.gmra.mxu0 %v790
    %v1087 = vpop.f32.mrf.mxu0
    %v1088 = vadd.f32 %v1075, %v1087
    %v1089 = vpop.f32.mrf.mxu0
    %1090 = vdwg.mxu0
    %1091 = vmatpush.bf16.msra.mxu0 %v1019
    %1092 = vmatpush.bf16.msra.mxu0 %v1018
    %1093 = vmatpush.bf16.msra.mxu0 %v1017
    %1094 = vmatpush.bf16.msra.mxu0 %v1016
    %1095 = vmatpush.bf16.msra.mxu0 %v1015
    %1096 = vmatpush.bf16.msra.mxu0 %v1014
    %1097 = vmatpush.bf16.msra.mxu0 %v1013
    %1098 = vmatpush.bf16.msra.mxu0 %v1012
    %1099 = vmatmul.bf16.gmra.mxu0 %v791
    %v1100 = vpop.f32.mrf.mxu0
    %v1101 = vadd.f32 %v1088, %v1100
    %v1102 = vpop.f32.mrf.mxu0
    %1103 = vdwg.mxu0
    %1104 = vst [vmem:[%s5] sm:$0xff] %v1101
    // Predicated region
    $region30: #{_lambda_.1} parent=1 // pred_check
      _
    $region31: #{_lambda_.1} parent=1 // pred_check_branch
      %1106 = sbr.rel (0) target = $region33
    $region32: #{_lambda_.1} parent=1 // pred_region
      _
    $region33: #{_lambda_.1} parent=1 // pred_fallthru
      _
    // Predicated region
    $region34: #{_lambda_.1} parent=1 // pred_check
      _
    $region35: #{_lambda_.1} parent=1 // pred_check_branch
      %1108 = sbr.rel (0) target = $region37
    $region36: #{_lambda_.1} parent=1 // pred_region
      _
    $region37: #{_lambda_.1} parent=1 // pred_fallthru
      _
    %1109 = vsyncpa [#allocation3], 1
    %1110 = vsyncpa [#allocation5], 1

// kernel: _lambda_.1
$region0: #{_lambda_.1}
  #allocation0 [shape = 'u32[]', space=smem, size = 0x4, offset = 0x4, fixed_abs, tag = 'smem constant byte address 0x4 - core index']
  #allocation1 [shape = 'u32[72,128]{1,0:T(1,128)}', space=vmem, size = 0x9000, scoped, tag = 'internal scratch']
  %s0 = inlined_call_operand.vmem [shape: bf16[8,352], index: 0, kind: input, shape index: {}]
  %s1 = inlined_call_operand.hbm [shape: bf16[128,512], index: 1, kind: input, shape index: {}]
  %s2 = inlined_call_operand.vmem [shape: f32[1,512], index: 2, kind: input, shape index: {}]
  %s3 = inlined_call_operand.hbm [shape: bf16[512,128], index: 3, kind: input, shape index: {}]
  %s4 = inlined_call_operand.vmem [shape: f32[1,128], index: 4, kind: input, shape index: {}]
  %s5 = inlined_call_operand.vmem [shape: f32[8,128], index: 5, kind: output, shape index: {}]
  %s6 = sld [smem:[#allocation0]]
  $region38: #{_lambda_.1} parent=0
    _
  %s8 = ssub.s32 1, %s6
  %s9 = scalar_select 0, %s8, %s6
  $region1: #{_lambda_.1} parent=0
    #allocation2 [shape = 'u8[131072]{0}', space=vmem, size = 0x20000, scoped, tag = 'input window, operand 1, single buffered']
    #allocation3 [shape = 's32[1]{0}', space=sflag, size = 0x4, scoped, tag = 'scoped memory for _lambda_.1']
    #allocation4 [shape = 'u8[131072]{0}', space=vmem, size = 0x20000, scoped, tag = 'input window, operand 3, single buffered']
    #allocation5 [shape = 's32[1]{0}', space=sflag, size = 0x4, scoped, tag = 'scoped memory for _lambda_.1']
    %10 = vsyncpa [#allocation3], 0
    %11 = vsyncpa [#allocation5], 0
    // Predicated region
    $region2: #{_lambda_.1} parent=1 // pred_check
      _
    $region3: #{_lambda_.1} parent=1 // pred_check_branch
      %13 = sbr.rel (0) target = $region5
    $region4: #{_lambda_.1} parent=1 // pred_region
      _
    $region5: #{_lambda_.1} parent=1 // pred_fallthru
      _
    // Predicated region
    $region6: #{_lambda_.1} parent=1 // pred_check
      _
    $region7: #{_lambda_.1} parent=1 // pred_check_branch
      %15 = sbr.rel (0) target = $region9
    $region8: #{_lambda_.1} parent=1 // pred_region
      %17 = vsyncadd [#allocation3], 0
      %s18 = sshll.u32 %s1, 4
      %s19 = int_to_ptr.hbm [resolvable:$true] %s18
      %s20 = sshll.u32 [#allocation2], 4
      %s21 = int_to_ptr.vmem [resolvable:$true] %s20
      %26 = dma.hbm_to_vmem [thread:$0]  %s19, 4096, %s21, [#allocation3], 256, 256, 16
    $region9: #{_lambda_.1} parent=1 // pred_fallthru
      _
    // Predicated region
    $region10: #{_lambda_.1} parent=1 // pred_check
      _
    $region11: #{_lambda_.1} parent=1 // pred_check_branch
      %28 = sbr.rel (0) target = $region13
    $region12: #{_lambda_.1} parent=1 // pred_region
      _
    $region13: #{_lambda_.1} parent=1 // pred_fallthru
      _
    // Predicated region
    $region14: #{_lambda_.1} parent=1 // pred_check
      _
    $region15: #{_lambda_.1} parent=1 // pred_check_branch
      %30 = sbr.rel (0) target = $region17
    $region16: #{_lambda_.1} parent=1 // pred_region
      %32 = vsyncadd [#allocation5], 0
      %s33 = sshll.u32 %s3, 4
      %s34 = int_to_ptr.hbm [resolvable:$true] %s33
      %s35 = sshll.u32 [#allocation4], 4
      %s36 = int_to_ptr.vmem [resolvable:$true] %s35
      %41 = dma.hbm_to_vmem [thread:$0]  %s34, 4096, %s36, [#allocation5], 64, 64, 4
    $region17: #{_lambda_.1} parent=1 // pred_fallthru
      _
    // Predicated region
    $region18: #{_lambda_.1} parent=1 // pred_check
      _
    $region19: #{_lambda_.1} parent=1 // pred_check_branch
      %43 = sbr.rel (0) target = $region21
    $region20: #{_lambda_.1} parent=1 // pred_region
      _
    $region21: #{_lambda_.1} parent=1 // pred_fallthru
      _
    // Predicated region
    $region22: #{_lambda_.1} parent=1 // pred_check
      _
    $region23: #{_lambda_.1} parent=1 // pred_check_branch
      %45 = sbr.rel (0) target = $region25
    $region24: #{_lambda_.1} parent=1 // pred_region
      %47 = dma.done [#allocation3], 4096
    $region25: #{_lambda_.1} parent=1 // pred_fallthru
      _
    // Predicated region
    $region26: #{_lambda_.1} parent=1 // pred_check
      _
    $region27: #{_lambda_.1} parent=1 // pred_check_branch
      %49 = sbr.rel (0) target = $region29
    $region28: #{_lambda_.1} parent=1 // pred_region
      %51 = dma.done [#allocation5], 4096
    $region29: #{_lambda_.1} parent=1 // pred_fallthru
      _
    %v52 = vld [vmem:[#allocation2] sm:$0xff]
    %v53 = vld [vmem:[#allocation2 + $0x8] sm:$0xff]
    %v54 = vld [vmem:[#allocation2 + $0x10] sm:$0xff]
    %v55 = vld [vmem:[#allocation2 + $0x18] sm:$0xff]
    %v56 = vld [vmem:[#allocation2 + $0x20] sm:$0xff]
    %v57 = vld [vmem:[#allocation2 + $0x28] sm:$0xff]
    %v58 = vld [vmem:[#allocation2 + $0x30] sm:$0xff]
    %v59 = vld [vmem:[#allocation2 + $0x38] sm:$0xff]
    %v60 = vld [vmem:[#allocation2 + $0x40] sm:$0xff]
    %v61 = vld [vmem:[#allocation2 + $0x48] sm:$0xff]
    %v62 = vld [vmem:[#allocation2 + $0x50] sm:$0xff]
    %v63 = vld [vmem:[#allocation2 + $0x58] sm:$0xff]
    %v64 = vld [vmem:[#allocation2 + $0x60] sm:$0xff]
    %v65 = vld [vmem:[#allocation2 + $0x68] sm:$0xff]
    %v66 = vld [vmem:[#allocation2 + $0x70] sm:$0xff]
    %v67 = vld [vmem:[#allocation2 + $0x78] sm:$0xff]
    %v68 = vld [vmem:[#allocation2 + $0x80] sm:$0xff]
    %v69 = vld [vmem:[#allocation2 + $0x88] sm:$0xff]
    %v70 = vld [vmem:[#allocation2 + $0x90] sm:$0xff]
    %v71 = vld [vmem:[#allocation2 + $0x98] sm:$0xff]
    %v72 = vld [vmem:[#allocation2 + $0xa0] sm:$0xff]
    %v73 = vld [vmem:[#allocation2 + $0xa8] sm:$0xff]
    %v74 = vld [vmem:[#allocation2 + $0xb0] sm:$0xff]
    %v75 = vld [vmem:[#allocation2 + $0xb8] sm:$0xff]
    %v76 = vld [vmem:[#allocation2 + $0xc0] sm:$0xff]
    %v77 = vld [vmem:[#allocation2 + $0xc8] sm:$0xff]
    %v78 = vld [vmem:[#allocation2 + $0xd0] sm:$0xff]
    %v79 = vld [vmem:[#allocation2 + $0xd8] sm:$0xff]
    %v80 = vld [vmem:[#allocation2 + $0xe0] sm:$0xff]
    %v81 = vld [vmem:[#allocation2 + $0xe8] sm:$0xff]
    %v82 = vld [vmem:[#allocation2 + $0xf0] sm:$0xff]
    %v83 = vld [vmem:[#allocation2 + $0xf8] sm:$0xff]
    %v84 = vld [vmem:[%s0] sm:$0xf]
    %v117 = vunpack.c.l.b16 %v52
    %v118 = vunpack.c.h.b16 %v52
    %v119 = vunpack.c.l.b16 %v53
    %v120 = vunpack.c.h.b16 %v53
    %v121 = vunpack.c.l.b16 %v54
    %v122 = vunpack.c.h.b16 %v54
    %v123 = vunpack.c.l.b16 %v55
    %v124 = vunpack.c.h.b16 %v55
    %v125 = vunpack.c.l.b16 %v56
    %v126 = vunpack.c.h.b16 %v56
    %v127 = vunpack.c.l.b16 %v57
    %v128 = vunpack.c.h.b16 %v57
    %v129 = vunpack.c.l.b16 %v58
    %v130 = vunpack.c.h.b16 %v58
    %v131 = vunpack.c.l.b16 %v59
    %v132 = vunpack.c.h.b16 %v59
    %v133 = vunpack.c.l.b16 %v60
    %v134 = vunpack.c.h.b16 %v60
    %v135 = vunpack.c.l.b16 %v61
    %v136 = vunpack.c.h.b16 %v61
    %v137 = vunpack.c.l.b16 %v62
    %v138 = vunpack.c.h.b16 %v62
    %v139 = vunpack.c.l.b16 %v63
    %v140 = vunpack.c.h.b16 %v63
    %v141 = vunpack.c.l.b16 %v64
    %v142 = vunpack.c.h.b16 %v64
    %v143 = vunpack.c.l.b16 %v65
    %v144 = vunpack.c.h.b16 %v65
    %v145 = vunpack.c.l.b16 %v66
    %v146 = vunpack.c.h.b16 %v66
    %v147 = vunpack.c.l.b16 %v67
    %v148 = vunpack.c.h.b16 %v67
    %v149 = vunpack.c.l.b16 %v68
    %v150 = vunpack.c.h.b16 %v68
    %v151 = vunpack.c.l.b16 %v69
    %v152 = vunpack.c.h.b16 %v69
    %v153 = vunpack.c.l.b16 %v70
    %v154 = vunpack.c.h.b16 %v70
    %v155 = vunpack.c.l.b16 %v71
    %v156 = vunpack.c.h.b16 %v71
    %v157 = vunpack.c.l.b16 %v72
    %v158 = vunpack.c.h.b16 %v72
    %v159 = vunpack.c.l.b16 %v73
    %v160 = vunpack.c.h.b16 %v73
    %v161 = vunpack.c.l.b16 %v74
    %v162 = vunpack.c.h.b16 %v74
    %v163 = vunpack.c.l.b16 %v75
    %v164 = vunpack.c.h.b16 %v75
    %v165 = vunpack.c.l.b16 %v76
    %v166 = vunpack.c.h.b16 %v76
    %v167 = vunpack.c.l.b16 %v77
    %v168 = vunpack.c.h.b16 %v77
    %v169 = vunpack.c.l.b16 %v78
    %v170 = vunpack.c.h.b16 %v78
    %v171 = vunpack.c.l.b16 %v79
    %v172 = vunpack.c.h.b16 %v79
    %v173 = vunpack.c.l.b16 %v80
    %v174 = vunpack.c.h.b16 %v80
    %v175 = vunpack.c.l.b16 %v81
    %v176 = vunpack.c.h.b16 %v81
    %v177 = vunpack.c.l.b16 %v82
    %v178 = vunpack.c.h.b16 %v82
    %v179 = vunpack.c.l.b16 %v83
    %v180 = vunpack.c.h.b16 %v83
    %v181 = vpack.c.b16 %v121, %v117
    %v182 = vpack.c.b16 %v122, %v118
    %v183 = vpack.c.b16 %v123, %v119
    %v184 = vpack.c.b16 %v124, %v120
    %v185 = vpack.c.b16 %v129, %v125
    %v186 = vpack.c.b16 %v130, %v126
    %v187 = vpack.c.b16 %v131, %v127
    %v188 = vpack.c.b16 %v132, %v128
    %v189 = vpack.c.b16 %v137, %v133
    %v190 = vpack.c.b16 %v138, %v134
    %v191 = vpack.c.b16 %v139, %v135
    %v192 = vpack.c.b16 %v140, %v136
    %v193 = vpack.c.b16 %v145, %v141
    %v194 = vpack.c.b16 %v146, %v142
    %v195 = vpack.c.b16 %v147, %v143
    %v196 = vpack.c.b16 %v148, %v144
    %v197 = vpack.c.b16 %v153, %v149
    %v198 = vpack.c.b16 %v154, %v150
    %v199 = vpack.c.b16 %v155, %v151
    %v200 = vpack.c.b16 %v156, %v152
    %v201 = vpack.c.b16 %v161, %v157
    %v202 = vpack.c.b16 %v162, %v158
    %v203 = vpack.c.b16 %v163, %v159
    %v204 = vpack.c.b16 %v164, %v160
    %v205 = vpack.c.b16 %v169, %v165
    %v206 = vpack.c.b16 %v170, %v166
    %v207 = vpack.c.b16 %v171, %v167
    %v208 = vpack.c.b16 %v172, %v168
    %v209 = vpack.c.b16 %v177, %v173
    %v210 = vpack.c.b16 %v178, %v174
    %v211 = vpack.c.b16 %v179, %v175
    %v212 = vpack.c.b16 %v180, %v176
    %245 = vmatpush.bf16.msra.mxu0 %v209
    %246 = vmatpush.bf16.msra.mxu0 %v205
    %247 = vmatpush.bf16.msra.mxu0 %v201
    %248 = vmatpush.bf16.msra.mxu0 %v197
    %249 = vmatpush.bf16.msra.mxu0 %v193
    %250 = vmatpush.bf16.msra.mxu0 %v189
    %251 = vmatpush.bf16.msra.mxu0 %v185
    %252 = vmatpush.bf16.msra.mxu0 %v181
    %253 = vmatmul.bf16.gmra.mxu0 %v84
    %v254 = vpop.f32.mrf.mxu0
    %v255 = vadd.f32 0.0, %v254
    %v256 = vpop.f32.mrf.mxu0
    %257 = vdwg.mxu0
    %258 = vmatpush.bf16.msra.mxu0 %v210
    %259 = vmatpush.bf16.msra.mxu0 %v206
    %260 = vmatpush.bf16.msra.mxu0 %v202
    %261 = vmatpush.bf16.msra.mxu0 %v198
    %262 = vmatpush.bf16.msra.mxu0 %v194
    %263 = vmatpush.bf16.msra.mxu0 %v190
    %264 = vmatpush.bf16.msra.mxu0 %v186
    %265 = vmatpush.bf16.msra.mxu0 %v182
    %266 = vmatmul.bf16.gmra.mxu0 %v84
    %v267 = vpop.f32.mrf.mxu0
    %v268 = vadd.f32 0.0, %v267
    %v269 = vpop.f32.mrf.mxu0
    %270 = vdwg.mxu0
    %271 = vmatpush.bf16.msra.mxu0 %v211
    %272 = vmatpush.bf16.msra.mxu0 %v207
    %273 = vmatpush.bf16.msra.mxu0 %v203
    %274 = vmatpush.bf16.msra.mxu0 %v199
    %275 = vmatpush.bf16.msra.mxu0 %v195
    %276 = vmatpush.bf16.msra.mxu0 %v191
    %277 = vmatpush.bf16.msra.mxu0 %v187
    %278 = vmatpush.bf16.msra.mxu0 %v183
    %279 = vmatmul.bf16.gmra.mxu0 %v84
    %v280 = vpop.f32.mrf.mxu0
    %v281 = vadd.f32 0.0, %v280
    %v282 = vpop.f32.mrf.mxu0
    %283 = vdwg.mxu0
    %284 = vmatpush.bf16.msra.mxu0 %v212
    %285 = vmatpush.bf16.msra.mxu0 %v208
    %286 = vmatpush.bf16.msra.mxu0 %v204
    %287 = vmatpush.bf16.msra.mxu0 %v200
    %288 = vmatpush.bf16.msra.mxu0 %v196
    %289 = vmatpush.bf16.msra.mxu0 %v192
    %290 = vmatpush.bf16.msra.mxu0 %v188
    %291 = vmatpush.bf16.msra.mxu0 %v184
    %292 = vmatmul.bf16.gmra.mxu0 %v84
    %v293 = vpop.f32.mrf.mxu0
    %v294 = vadd.f32 0.0, %v293
    %v295 = vpop.f32.mrf.mxu0
    %296 = vdwg.mxu0
    %v297 = vld [vmem:[%s0] sm:$0xff]
    %v299 = vunpack.c.l.b16 %v297
    %v300 = vunpack.c.h.b16 %v297
    %v301 = vpack.c.b16 %v299, %v299
    %v302 = vpack.c.b16 %v300, %v300
    %303 = vrot.lane.b32.xlu0 %v301, 96
    %v304 = vpop.permute.xlu0 %303
    %305 = vrot.lane.b32.xlu0 %v302, 96
    %v306 = vpop.permute.xlu0 %305
    %vm307 = vcmask 785408
    %v308 = vsel %vm307, %v304, %v306
    %310 = vmatpush.bf16.msra.mxu0 %v209
    %311 = vmatpush.bf16.msra.mxu0 %v205
    %312 = vmatpush.bf16.msra.mxu0 %v201
    %313 = vmatpush.bf16.msra.mxu0 %v197
    %314 = vmatpush.bf16.msra.mxu0 %v193
    %315 = vmatpush.bf16.msra.mxu0 %v189
    %316 = vmatpush.bf16.msra.mxu0 %v185
    %317 = vmatpush.bf16.msra.mxu0 %v181
    %318 = vmatmul.bf16.gmra.mxu0 %v308
    %v319 = vpop.f32.mrf.mxu0
    %v320 = vadd.f32 0.0, %v319
    %v321 = vpop.f32.mrf.mxu0
    %322 = vdwg.mxu0
    %323 = vmatpush.bf16.msra.mxu0 %v210
    %324 = vmatpush.bf16.msra.mxu0 %v206
    %325 = vmatpush.bf16.msra.mxu0 %v202
    %326 = vmatpush.bf16.msra.mxu0 %v198
    %327 = vmatpush.bf16.msra.mxu0 %v194
    %328 = vmatpush.bf16.msra.mxu0 %v190
    %329 = vmatpush.bf16.msra.mxu0 %v186
    %330 = vmatpush.bf16.msra.mxu0 %v182
    %331 = vmatmul.bf16.gmra.mxu0 %v308
    %v332 = vpop.f32.mrf.mxu0
    %v333 = vadd.f32 0.0, %v332
    %v334 = vpop.f32.mrf.mxu0
    %335 = vdwg.mxu0
    %336 = vmatpush.bf16.msra.mxu0 %v211
    %337 = vmatpush.bf16.msra.mxu0 %v207
    %338 = vmatpush.bf16.msra.mxu0 %v203
    %339 = vmatpush.bf16.msra.mxu0 %v199
    %340 = vmatpush.bf16.msra.mxu0 %v195
    %341 = vmatpush.bf16.msra.mxu0 %v191
    %342 = vmatpush.bf16.msra.mxu0 %v187
    %343 = vmatpush.bf16.msra.mxu0 %v183
    %344 = vmatmul.bf16.gmra.mxu0 %v308
    %v345 = vpop.f32.mrf.mxu0
    %v346 = vadd.f32 0.0, %v345
    %v347 = vpop.f32.mrf.mxu0
    %348 = vdwg.mxu0
    %349 = vmatpush.bf16.msra.mxu0 %v212
    %350 = vmatpush.bf16.msra.mxu0 %v208
    %351 = vmatpush.bf16.msra.mxu0 %v204
    %352 = vmatpush.bf16.msra.mxu0 %v200
    %353 = vmatpush.bf16.msra.mxu0 %v196
    %354 = vmatpush.bf16.msra.mxu0 %v192
    %355 = vmatpush.bf16.msra.mxu0 %v188
    %356 = vmatpush.bf16.msra.mxu0 %v184
    %357 = vmatmul.bf16.gmra.mxu0 %v308
    %v358 = vpop.f32.mrf.mxu0
    %v359 = vadd.f32 0.0, %v358
    %v360 = vpop.f32.mrf.mxu0
    %361 = vdwg.mxu0
    %362 = vrot.lane.b32.xlu0 %v301, 64
    %v363 = vpop.permute.xlu0 %362
    %364 = vrot.lane.b32.xlu0 %v302, 64
    %v365 = vpop.permute.xlu0 %364
    %vm366 = vcmask 523264
    %v367 = vsel %vm366, %v363, %v365
    %369 = vmatpush.bf16.msra.mxu0 %v209
    %370 = vmatpush.bf16.msra.mxu0 %v205
    %371 = vmatpush.bf16.msra.mxu0 %v201
    %372 = vmatpush.bf16.msra.mxu0 %v197
    %373 = vmatpush.bf16.msra.mxu0 %v193
    %374 = vmatpush.bf16.msra.mxu0 %v189
    %375 = vmatpush.bf16.msra.mxu0 %v185
    %376 = vmatpush.bf16.msra.mxu0 %v181
    %377 = vmatmul.bf16.gmra.mxu0 %v367
    %v378 = vpop.f32.mrf.mxu0
    %v379 = vadd.f32 0.0, %v378
    %v380 = vpop.f32.mrf.mxu0
    %381 = vdwg.mxu0
    %382 = vmatpush.bf16.msra.mxu0 %v210
    %383 = vmatpush.bf16.msra.mxu0 %v206
    %384 = vmatpush.bf16.msra.mxu0 %v202
    %385 = vmatpush.bf16.msra.mxu0 %v198
    %386 = vmatpush.bf16.msra.mxu0 %v194
    %387 = vmatpush.bf16.msra.mxu0 %v190
    %388 = vmatpush.bf16.msra.mxu0 %v186
    %389 = vmatpush.bf16.msra.mxu0 %v182
    %390 = vmatmul.bf16.gmra.mxu0 %v367
    %v391 = vpop.f32.mrf.mxu0
    %v392 = vadd.f32 0.0, %v391
    %v393 = vpop.f32.mrf.mxu0
    %394 = vdwg.mxu0
    %395 = vmatpush.bf16.msra.mxu0 %v211
    %396 = vmatpush.bf16.msra.mxu0 %v207
    %397 = vmatpush.bf16.msra.mxu0 %v203
    %398 = vmatpush.bf16.msra.mxu0 %v199
    %399 = vmatpush.bf16.msra.mxu0 %v195
    %400 = vmatpush.bf16.msra.mxu0 %v191
    %401 = vmatpush.bf16.msra.mxu0 %v187
    %402 = vmatpush.bf16.msra.mxu0 %v183
    %403 = vmatmul.bf16.gmra.mxu0 %v367
    %v404 = vpop.f32.mrf.mxu0
    %v405 = vadd.f32 0.0, %v404
    %v406 = vpop.f32.mrf.mxu0
    %407 = vdwg.mxu0
    %408 = vmatpush.bf16.msra.mxu0 %v212
    %409 = vmatpush.bf16.msra.mxu0 %v208
    %410 = vmatpush.bf16.msra.mxu0 %v204
    %411 = vmatpush.bf16.msra.mxu0 %v200
    %412 = vmatpush.bf16.msra.mxu0 %v196
    %413 = vmatpush.bf16.msra.mxu0 %v192
    %414 = vmatpush.bf16.msra.mxu0 %v188
    %415 = vmatpush.bf16.msra.mxu0 %v184
    %416 = vmatmul.bf16.gmra.mxu0 %v367
    %v417 = vpop.f32.mrf.mxu0
    %v418 = vadd.f32 0.0, %v417
    %v419 = vpop.f32.mrf.mxu0
    %420 = vdwg.mxu0
    %v421 = vmax.f32 %v255, %v379
    %v422 = vmax.f32 %v268, %v392
    %v423 = vmax.f32 %v281, %v405
    %v424 = vmax.f32 %v294, %v418
    %425 = vrot.lane.b32.xlu0 %v301, 32
    %v426 = vpop.permute.xlu0 %425
    %427 = vrot.lane.b32.xlu0 %v302, 32
    %v428 = vpop.permute.xlu0 %427
    %vm429 = vcmask 261120
    %v430 = vsel %vm429, %v426, %v428
    %432 = vmatpush.bf16.msra.mxu0 %v209
    %433 = vmatpush.bf16.msra.mxu0 %v205
    %434 = vmatpush.bf16.msra.mxu0 %v201
    %435 = vmatpush.bf16.msra.mxu0 %v197
    %436 = vmatpush.bf16.msra.mxu0 %v193
    %437 = vmatpush.bf16.msra.mxu0 %v189
    %438 = vmatpush.bf16.msra.mxu0 %v185
    %439 = vmatpush.bf16.msra.mxu0 %v181
    %440 = vmatmul.bf16.gmra.mxu0 %v430
    %v441 = vpop.f32.mrf.mxu0
    %v442 = vadd.f32 0.0, %v441
    %v443 = vpop.f32.mrf.mxu0
    %444 = vdwg.mxu0
    %445 = vmatpush.bf16.msra.mxu0 %v210
    %446 = vmatpush.bf16.msra.mxu0 %v206
    %447 = vmatpush.bf16.msra.mxu0 %v202
    %448 = vmatpush.bf16.msra.mxu0 %v198
    %449 = vmatpush.bf16.msra.mxu0 %v194
    %450 = vmatpush.bf16.msra.mxu0 %v190
    %451 = vmatpush.bf16.msra.mxu0 %v186
    %452 = vmatpush.bf16.msra.mxu0 %v182
    %453 = vmatmul.bf16.gmra.mxu0 %v430
    %v454 = vpop.f32.mrf.mxu0
    %v455 = vadd.f32 0.0, %v454
    %v456 = vpop.f32.mrf.mxu0
    %457 = vdwg.mxu0
    %458 = vmatpush.bf16.msra.mxu0 %v211
    %459 = vmatpush.bf16.msra.mxu0 %v207
    %460 = vmatpush.bf16.msra.mxu0 %v203
    %461 = vmatpush.bf16.msra.mxu0 %v199
    %462 = vmatpush.bf16.msra.mxu0 %v195
    %463 = vmatpush.bf16.msra.mxu0 %v191
    %464 = vmatpush.bf16.msra.mxu0 %v187
    %465 = vmatpush.bf16.msra.mxu0 %v183
    %466 = vmatmul.bf16.gmra.mxu0 %v430
    %v467 = vpop.f32.mrf.mxu0
    %v468 = vadd.f32 0.0, %v467
    %v469 = vpop.f32.mrf.mxu0
    %470 = vdwg.mxu0
    %471 = vmatpush.bf16.msra.mxu0 %v212
    %472 = vmatpush.bf16.msra.mxu0 %v208
    %473 = vmatpush.bf16.msra.mxu0 %v204
    %474 = vmatpush.bf16.msra.mxu0 %v200
    %475 = vmatpush.bf16.msra.mxu0 %v196
    %476 = vmatpush.bf16.msra.mxu0 %v192
    %477 = vmatpush.bf16.msra.mxu0 %v188
    %478 = vmatpush.bf16.msra.mxu0 %v184
    %479 = vmatmul.bf16.gmra.mxu0 %v430
    %v480 = vpop.f32.mrf.mxu0
    %v481 = vadd.f32 0.0, %v480
    %v482 = vpop.f32.mrf.mxu0
    %483 = vdwg.mxu0
    %v484 = vmax.f32 %v320, %v442
    %v485 = vmax.f32 %v333, %v455
    %v486 = vmax.f32 %v346, %v468
    %v487 = vmax.f32 %v359, %v481
    %v488 = vld [vmem:[%s0 + $0x4] sm:$0xf]
    %489 = vmatpush.bf16.msra.mxu0 %v209
    %490 = vmatpush.bf16.msra.mxu0 %v205
    %491 = vmatpush.bf16.msra.mxu0 %v201
    %492 = vmatpush.bf16.msra.mxu0 %v197
    %493 = vmatpush.bf16.msra.mxu0 %v193
    %494 = vmatpush.bf16.msra.mxu0 %v189
    %495 = vmatpush.bf16.msra.mxu0 %v185
    %496 = vmatpush.bf16.msra.mxu0 %v181
    %497 = vmatmul.bf16.gmra.mxu0 %v488
    %v498 = vpop.f32.mrf.mxu0
    %v499 = vadd.f32 0.0, %v498
    %v500 = vpop.f32.mrf.mxu0
    %501 = vdwg.mxu0
    %502 = vmatpush.bf16.msra.mxu0 %v210
    %503 = vmatpush.bf16.msra.mxu0 %v206
    %504 = vmatpush.bf16.msra.mxu0 %v202
    %505 = vmatpush.bf16.msra.mxu0 %v198
    %506 = vmatpush.bf16.msra.mxu0 %v194
    %507 = vmatpush.bf16.msra.mxu0 %v190
    %508 = vmatpush.bf16.msra.mxu0 %v186
    %509 = vmatpush.bf16.msra.mxu0 %v182
    %510 = vmatmul.bf16.gmra.mxu0 %v488
    %v511 = vpop.f32.mrf.mxu0
    %v512 = vadd.f32 0.0, %v511
    %v513 = vpop.f32.mrf.mxu0
    %514 = vdwg.mxu0
    %515 = vmatpush.bf16.msra.mxu0 %v211
    %516 = vmatpush.bf16.msra.mxu0 %v207
    %517 = vmatpush.bf16.msra.mxu0 %v203
    %518 = vmatpush.bf16.msra.mxu0 %v199
    %519 = vmatpush.bf16.msra.mxu0 %v195
    %520 = vmatpush.bf16.msra.mxu0 %v191
    %521 = vmatpush.bf16.msra.mxu0 %v187
    %522 = vmatpush.bf16.msra.mxu0 %v183
    %523 = vmatmul.bf16.gmra.mxu0 %v488
    %v524 = vpop.f32.mrf.mxu0
    %v525 = vadd.f32 0.0, %v524
    %v526 = vpop.f32.mrf.mxu0
    %527 = vdwg.mxu0
    %528 = vmatpush.bf16.msra.mxu0 %v212
    %529 = vmatpush.bf16.msra.mxu0 %v208
    %530 = vmatpush.bf16.msra.mxu0 %v204
    %531 = vmatpush.bf16.msra.mxu0 %v200
    %532 = vmatpush.bf16.msra.mxu0 %v196
    %533 = vmatpush.bf16.msra.mxu0 %v192
    %534 = vmatpush.bf16.msra.mxu0 %v188
    %535 = vmatpush.bf16.msra.mxu0 %v184
    %536 = vmatmul.bf16.gmra.mxu0 %v488
    %v537 = vpop.f32.mrf.mxu0
    %v538 = vadd.f32 0.0, %v537
    %v539 = vpop.f32.mrf.mxu0
    %540 = vdwg.mxu0
    %v541 = vmax.f32 %v421, %v499
    %v542 = vmax.f32 %v422, %v512
    %v543 = vmax.f32 %v423, %v525
    %v544 = vmax.f32 %v424, %v538
    %v545 = vld [vmem:[%s0 + $0x4] sm:$0xff]
    %v547 = vunpack.c.l.b16 %v545
    %v548 = vunpack.c.h.b16 %v545
    %v549 = vpack.c.b16 %v547, %v547
    %v550 = vpack.c.b16 %v548, %v548
    %551 = vrot.lane.b32.xlu0 %v549, 96
    %v552 = vpop.permute.xlu0 %551
    %553 = vrot.lane.b32.xlu0 %v550, 96
    %v554 = vpop.permute.xlu0 %553
    %v555 = vsel %vm307, %v552, %v554
    %557 = vmatpush.bf16.msra.mxu0 %v209
    %558 = vmatpush.bf16.msra.mxu0 %v205
    %559 = vmatpush.bf16.msra.mxu0 %v201
    %560 = vmatpush.bf16.msra.mxu0 %v197
    %561 = vmatpush.bf16.msra.mxu0 %v193
    %562 = vmatpush.bf16.msra.mxu0 %v189
    %563 = vmatpush.bf16.msra.mxu0 %v185
    %564 = vmatpush.bf16.msra.mxu0 %v181
    %565 = vmatmul.bf16.gmra.mxu0 %v555
    %v566 = vpop.f32.mrf.mxu0
    %v567 = vadd.f32 0.0, %v566
    %v568 = vpop.f32.mrf.mxu0
    %569 = vdwg.mxu0
    %570 = vmatpush.bf16.msra.mxu0 %v210
    %571 = vmatpush.bf16.msra.mxu0 %v206
    %572 = vmatpush.bf16.msra.mxu0 %v202
    %573 = vmatpush.bf16.msra.mxu0 %v198
    %574 = vmatpush.bf16.msra.mxu0 %v194
    %575 = vmatpush.bf16.msra.mxu0 %v190
    %576 = vmatpush.bf16.msra.mxu0 %v186
    %577 = vmatpush.bf16.msra.mxu0 %v182
    %578 = vmatmul.bf16.gmra.mxu0 %v555
    %v579 = vpop.f32.mrf.mxu0
    %v580 = vadd.f32 0.0, %v579
    %v581 = vpop.f32.mrf.mxu0
    %582 = vdwg.mxu0
    %583 = vmatpush.bf16.msra.mxu0 %v211
    %584 = vmatpush.bf16.msra.mxu0 %v207
    %585 = vmatpush.bf16.msra.mxu0 %v203
    %586 = vmatpush.bf16.msra.mxu0 %v199
    %587 = vmatpush.bf16.msra.mxu0 %v195
    %588 = vmatpush.bf16.msra.mxu0 %v191
    %589 = vmatpush.bf16.msra.mxu0 %v187
    %590 = vmatpush.bf16.msra.mxu0 %v183
    %591 = vmatmul.bf16.gmra.mxu0 %v555
    %v592 = vpop.f32.mrf.mxu0
    %v593 = vadd.f32 0.0, %v592
    %v594 = vpop.f32.mrf.mxu0
    %595 = vdwg.mxu0
    %596 = vmatpush.bf16.msra.mxu0 %v212
    %597 = vmatpush.bf16.msra.mxu0 %v208
    %598 = vmatpush.bf16.msra.mxu0 %v204
    %599 = vmatpush.bf16.msra.mxu0 %v200
    %600 = vmatpush.bf16.msra.mxu0 %v196
    %601 = vmatpush.bf16.msra.mxu0 %v192
    %602 = vmatpush.bf16.msra.mxu0 %v188
    %603 = vmatpush.bf16.msra.mxu0 %v184
    %604 = vmatmul.bf16.gmra.mxu0 %v555
    %v605 = vpop.f32.mrf.mxu0
    %v606 = vadd.f32 0.0, %v605
    %v607 = vpop.f32.mrf.mxu0
    %608 = vdwg.mxu0
    %v609 = vlaneseq
    %v610 = vand.u32 %v609, 127
    %v611 = vadd.s32 %v610, 128
    %v612 = vadd.s32 %v610, 256
    %v613 = vadd.s32 %v610, 384
    %vm614 = vcmp.lt.s32.totalorder %v610, 384
    %vm615 = vcmp.lt.s32.totalorder %v611, 384
    %vm616 = vcmp.lt.s32.totalorder %v612, 384
    %vm617 = vcmp.lt.s32.totalorder %v613, 384
    %v618 = vsel %vm614, %v567, -inf
    %v619 = vsel %vm615, %v580, -inf
    %v620 = vsel %vm616, %v593, -inf
    %v621 = vsel %vm617, %v606, -inf
    %v622 = vmax.f32 %v484, %v618
    %v623 = vmax.f32 %v485, %v619
    %v624 = vmax.f32 %v486, %v620
    %v625 = vmax.f32 %v487, %v621
    %626 = vrot.lane.b32.xlu0 %v549, 64
    %v627 = vpop.permute.xlu0 %626
    %628 = vrot.lane.b32.xlu0 %v550, 64
    %v629 = vpop.permute.xlu0 %628
    %v630 = vsel %vm366, %v627, %v629
    %632 = vmatpush.bf16.msra.mxu0 %v209
    %633 = vmatpush.bf16.msra.mxu0 %v205
    %634 = vmatpush.bf16.msra.mxu0 %v201
    %635 = vmatpush.bf16.msra.mxu0 %v197
    %636 = vmatpush.bf16.msra.mxu0 %v193
    %637 = vmatpush.bf16.msra.mxu0 %v189
    %638 = vmatpush.bf16.msra.mxu0 %v185
    %639 = vmatpush.bf16.msra.mxu0 %v181
    %640 = vmatmul.bf16.gmra.mxu0 %v630
    %v641 = vpop.f32.mrf.mxu0
    %v642 = vadd.f32 0.0, %v641
    %v643 = vpop.f32.mrf.mxu0
    %644 = vdwg.mxu0
    %645 = vmatpush.bf16.msra.mxu0 %v210
    %646 = vmatpush.bf16.msra.mxu0 %v206
    %647 = vmatpush.bf16.msra.mxu0 %v202
    %648 = vmatpush.bf16.msra.mxu0 %v198
    %649 = vmatpush.bf16.msra.mxu0 %v194
    %650 = vmatpush.bf16.msra.mxu0 %v190
    %651 = vmatpush.bf16.msra.mxu0 %v186
    %652 = vmatpush.bf16.msra.mxu0 %v182
    %653 = vmatmul.bf16.gmra.mxu0 %v630
    %v654 = vpop.f32.mrf.mxu0
    %v655 = vadd.f32 0.0, %v654
    %v656 = vpop.f32.mrf.mxu0
    %657 = vdwg.mxu0
    %658 = vmatpush.bf16.msra.mxu0 %v211
    %659 = vmatpush.bf16.msra.mxu0 %v207
    %660 = vmatpush.bf16.msra.mxu0 %v203
    %661 = vmatpush.bf16.msra.mxu0 %v199
    %662 = vmatpush.bf16.msra.mxu0 %v195
    %663 = vmatpush.bf16.msra.mxu0 %v191
    %664 = vmatpush.bf16.msra.mxu0 %v187
    %665 = vmatpush.bf16.msra.mxu0 %v183
    %666 = vmatmul.bf16.gmra.mxu0 %v630
    %v667 = vpop.f32.mrf.mxu0
    %v668 = vadd.f32 0.0, %v667
    %v669 = vpop.f32.mrf.mxu0
    %670 = vdwg.mxu0
    %671 = vmatpush.bf16.msra.mxu0 %v212
    %672 = vmatpush.bf16.msra.mxu0 %v208
    %673 = vmatpush.bf16.msra.mxu0 %v204
    %674 = vmatpush.bf16.msra.mxu0 %v200
    %675 = vmatpush.bf16.msra.mxu0 %v196
    %676 = vmatpush.bf16.msra.mxu0 %v192
    %677 = vmatpush.bf16.msra.mxu0 %v188
    %678 = vmatpush.bf16.msra.mxu0 %v184
    %679 = vmatmul.bf16.gmra.mxu0 %v630
    %v680 = vpop.f32.mrf.mxu0
    %v681 = vadd.f32 0.0, %v680
    %v682 = vpop.f32.mrf.mxu0
    %683 = vdwg.mxu0
    %vm684 = vcmp.lt.s32.totalorder %v610, 256
    %vm685 = vcmp.lt.s32.totalorder %v611, 256
    %vm686 = vcmp.lt.s32.totalorder %v612, 256
    %vm687 = vcmp.lt.s32.totalorder %v613, 256
    %v688 = vsel %vm684, %v642, -inf
    %v689 = vsel %vm685, %v655, -inf
    %v690 = vsel %vm686, %v668, -inf
    %v691 = vsel %vm687, %v681, -inf
    %v692 = vmax.f32 %v541, %v688
    %v693 = vmax.f32 %v542, %v689
    %v694 = vmax.f32 %v543, %v690
    %v695 = vmax.f32 %v544, %v691
    %696 = vrot.lane.b32.xlu0 %v549, 32
    %v697 = vpop.permute.xlu0 %696
    %698 = vrot.lane.b32.xlu0 %v550, 32
    %v699 = vpop.permute.xlu0 %698
    %v700 = vsel %vm429, %v697, %v699
    %702 = vmatpush.bf16.msra.mxu0 %v209
    %703 = vmatpush.bf16.msra.mxu0 %v205
    %704 = vmatpush.bf16.msra.mxu0 %v201
    %705 = vmatpush.bf16.msra.mxu0 %v197
    %706 = vmatpush.bf16.msra.mxu0 %v193
    %707 = vmatpush.bf16.msra.mxu0 %v189
    %708 = vmatpush.bf16.msra.mxu0 %v185
    %709 = vmatpush.bf16.msra.mxu0 %v181
    %710 = vmatmul.bf16.gmra.mxu0 %v700
    %v711 = vpop.f32.mrf.mxu0
    %v712 = vadd.f32 0.0, %v711
    %v713 = vpop.f32.mrf.mxu0
    %714 = vdwg.mxu0
    %715 = vmatpush.bf16.msra.mxu0 %v210
    %716 = vmatpush.bf16.msra.mxu0 %v206
    %717 = vmatpush.bf16.msra.mxu0 %v202
    %718 = vmatpush.bf16.msra.mxu0 %v198
    %719 = vmatpush.bf16.msra.mxu0 %v194
    %720 = vmatpush.bf16.msra.mxu0 %v190
    %721 = vmatpush.bf16.msra.mxu0 %v186
    %722 = vmatpush.bf16.msra.mxu0 %v182
    %723 = vmatmul.bf16.gmra.mxu0 %v700
    %v724 = vpop.f32.mrf.mxu0
    %v725 = vadd.f32 0.0, %v724
    %v726 = vpop.f32.mrf.mxu0
    %727 = vdwg.mxu0
    %728 = vmatpush.bf16.msra.mxu0 %v211
    %729 = vmatpush.bf16.msra.mxu0 %v207
    %730 = vmatpush.bf16.msra.mxu0 %v203
    %731 = vmatpush.bf16.msra.mxu0 %v199
    %732 = vmatpush.bf16.msra.mxu0 %v195
    %733 = vmatpush.bf16.msra.mxu0 %v191
    %734 = vmatpush.bf16.msra.mxu0 %v187
    %735 = vmatpush.bf16.msra.mxu0 %v183
    %736 = vmatmul.bf16.gmra.mxu0 %v700
    %v737 = vpop.f32.mrf.mxu0
    %v738 = vadd.f32 0.0, %v737
    %v739 = vpop.f32.mrf.mxu0
    %740 = vdwg.mxu0
    %741 = vmatpush.bf16.msra.mxu0 %v212
    %742 = vmatpush.bf16.msra.mxu0 %v208
    %743 = vmatpush.bf16.msra.mxu0 %v204
    %744 = vmatpush.bf16.msra.mxu0 %v200
    %745 = vmatpush.bf16.msra.mxu0 %v196
    %746 = vmatpush.bf16.msra.mxu0 %v192
    %747 = vmatpush.bf16.msra.mxu0 %v188
    %748 = vmatpush.bf16.msra.mxu0 %v184
    %749 = vmatmul.bf16.gmra.mxu0 %v700
    %v750 = vpop.f32.mrf.mxu0
    %v751 = vadd.f32 0.0, %v750
    %v752 = vpop.f32.mrf.mxu0
    %753 = vdwg.mxu0
    %vm754 = vcmp.lt.s32.totalorder %v610, 128
    %vm755 = vcmp.lt.s32.totalorder %v611, 128
    %vm756 = vcmp.lt.s32.totalorder %v612, 128
    %vm757 = vcmp.lt.s32.totalorder %v613, 128
    %v758 = vsel %vm754, %v712, -inf
    %v759 = vsel %vm755, %v725, -inf
    %v760 = vsel %vm756, %v738, -inf
    %v761 = vsel %vm757, %v751, -inf
    %v762 = vmax.f32 %v622, %v758
    %v763 = vmax.f32 %v623, %v759
    %v764 = vmax.f32 %v624, %v760
    %v765 = vmax.f32 %v625, %v761
    %v766 = vmax.f32 %v692, %v762
    %v767 = vmax.f32 %v693, %v763
    %v768 = vmax.f32 %v694, %v764
    %v769 = vmax.f32 %v695, %v765
    %v770 = vld [vmem:[%s2] sm:$0xf]
    %v772 = vperm.slane %v770, 0
    %v773 = vperm.slane %v770, 1
    %v774 = vperm.slane %v770, 2
    %v775 = vperm.slane %v770, 3
    %v780 = vadd.f32 %v766, %v772
    %v781 = vadd.f32 %v767, %v773
    %v782 = vadd.f32 %v768, %v774
    %v783 = vadd.f32 %v769, %v775
    %v784 = vmax.f32 %v780, 0.0
    %v785 = vmax.f32 %v781, 0.0
    %v786 = vmax.f32 %v782, 0.0
    %v787 = vmax.f32 %v783, 0.0
    %v788 = vpack.c.bf16 %v784, %v784
    %v789 = vpack.c.bf16 %v785, %v785
    %v790 = vpack.c.bf16 %v786, %v786
    %v791 = vpack.c.bf16 %v787, %v787
    %v792 = vld [vmem:[#allocation4] sm:$0xf]
    %v793 = vld [vmem:[#allocation4 + $0x4] sm:$0xf]
    %v794 = vld [vmem:[#allocation4 + $0x8] sm:$0xf]
    %v795 = vld [vmem:[#allocation4 + $0xc] sm:$0xf]
    %v796 = vld [vmem:[#allocation4 + $0x10] sm:$0xf]
    %v797 = vld [vmem:[#allocation4 + $0x14] sm:$0xf]
    %v798 = vld [vmem:[#allocation4 + $0x18] sm:$0xf]
    %v799 = vld [vmem:[#allocation4 + $0x1c] sm:$0xf]
    %v800 = vld [vmem:[#allocation4 + $0x20] sm:$0xf]
    %v801 = vld [vmem:[#allocation4 + $0x24] sm:$0xf]
    %v802 = vld [vmem:[#allocation4 + $0x28] sm:$0xf]
    %v803 = vld [vmem:[#allocation4 + $0x2c] sm:$0xf]
    %v804 = vld [vmem:[#allocation4 + $0x30] sm:$0xf]
    %v805 = vld [vmem:[#allocation4 + $0x34] sm:$0xf]
    %v806 = vld [vmem:[#allocation4 + $0x38] sm:$0xf]
    %v807 = vld [vmem:[#allocation4 + $0x3c] sm:$0xf]
    %v808 = vld [vmem:[#allocation4 + $0x40] sm:$0xf]
    %v809 = vld [vmem:[#allocation4 + $0x44] sm:$0xf]
    %v810 = vld [vmem:[#allocation4 + $0x48] sm:$0xf]
    %v811 = vld [vmem:[#allocation4 + $0x4c] sm:$0xf]
    %v812 = vld [vmem:[#allocation4 + $0x50] sm:$0xf]
    %v813 = vld [vmem:[#allocation4 + $0x54] sm:$0xf]
    %v814 = vld [vmem:[#allocation4 + $0x58] sm:$0xf]
    %v815 = vld [vmem:[#allocation4 + $0x5c] sm:$0xf]
    %v816 = vld [vmem:[#allocation4 + $0x60] sm:$0xf]
    %v817 = vld [vmem:[#allocation4 + $0x64] sm:$0xf]
    %v818 = vld [vmem:[#allocation4 + $0x68] sm:$0xf]
    %v819 = vld [vmem:[#allocation4 + $0x6c] sm:$0xf]
    %v820 = vld [vmem:[#allocation4 + $0x70] sm:$0xf]
    %v821 = vld [vmem:[#allocation4 + $0x74] sm:$0xf]
    %v822 = vld [vmem:[#allocation4 + $0x78] sm:$0xf]
    %v823 = vld [vmem:[#allocation4 + $0x7c] sm:$0xf]
    %v824 = vld [vmem:[#allocation4 + $0x80] sm:$0xf]
    %v825 = vld [vmem:[#allocation4 + $0x84] sm:$0xf]
    %v826 = vld [vmem:[#allocation4 + $0x88] sm:$0xf]
    %v827 = vld [vmem:[#allocation4 + $0x8c] sm:$0xf]
    %v828 = vld [vmem:[#allocation4 + $0x90] sm:$0xf]
    %v829 = vld [vmem:[#allocation4 + $0x94] sm:$0xf]
    %v830 = vld [vmem:[#allocation4 + $0x98] sm:$0xf]
    %v831 = vld [vmem:[#allocation4 + $0x9c] sm:$0xf]
    %v832 = vld [vmem:[#allocation4 + $0xa0] sm:$0xf]
    %v833 = vld [vmem:[#allocation4 + $0xa4] sm:$0xf]
    %v834 = vld [vmem:[#allocation4 + $0xa8] sm:$0xf]
    %v835 = vld [vmem:[#allocation4 + $0xac] sm:$0xf]
    %v836 = vld [vmem:[#allocation4 + $0xb0] sm:$0xf]
    %v837 = vld [vmem:[#allocation4 + $0xb4] sm:$0xf]
    %v838 = vld [vmem:[#allocation4 + $0xb8] sm:$0xf]
    %v839 = vld [vmem:[#allocation4 + $0xbc] sm:$0xf]
    %v840 = vld [vmem:[#allocation4 + $0xc0] sm:$0xf]
    %v841 = vld [vmem:[#allocation4 + $0xc4] sm:$0xf]
    %v842 = vld [vmem:[#allocation4 + $0xc8] sm:$0xf]
    %v843 = vld [vmem:[#allocation4 + $0xcc] sm:$0xf]
    %v844 = vld [vmem:[#allocation4 + $0xd0] sm:$0xf]
    %v845 = vld [vmem:[#allocation4 + $0xd4] sm:$0xf]
    %v846 = vld [vmem:[#allocation4 + $0xd8] sm:$0xf]
    %v847 = vld [vmem:[#allocation4 + $0xdc] sm:$0xf]
    %v848 = vld [vmem:[#allocation4 + $0xe0] sm:$0xf]
    %v849 = vld [vmem:[#allocation4 + $0xe4] sm:$0xf]
    %v850 = vld [vmem:[#allocation4 + $0xe8] sm:$0xf]
    %v851 = vld [vmem:[#allocation4 + $0xec] sm:$0xf]
    %v852 = vld [vmem:[#allocation4 + $0xf0] sm:$0xf]
    %v853 = vld [vmem:[#allocation4 + $0xf4] sm:$0xf]
    %v854 = vld [vmem:[#allocation4 + $0xf8] sm:$0xf]
    %v855 = vld [vmem:[#allocation4 + $0xfc] sm:$0xf]
    %v856 = vld [vmem:[%s4] sm:$0x1]
    %v858 = vperm.slane %v856, 0
    %v924 = vunpack.c.l.b16 %v792
    %v925 = vunpack.c.l.b16 %v793
    %v926 = vunpack.c.l.b16 %v794
    %v927 = vunpack.c.l.b16 %v795
    %v928 = vunpack.c.l.b16 %v796
    %v929 = vunpack.c.l.b16 %v797
    %v930 = vunpack.c.l.b16 %v798
    %v931 = vunpack.c.l.b16 %v799
    %v932 = vunpack.c.l.b16 %v800
    %v933 = vunpack.c.l.b16 %v801
    %v934 = vunpack.c.l.b16 %v802
    %v935 = vunpack.c.l.b16 %v803
    %v936 = vunpack.c.l.b16 %v804
    %v937 = vunpack.c.l.b16 %v805
    %v938 = vunpack.c.l.b16 %v806
    %v939 = vunpack.c.l.b16 %v807
    %v940 = vunpack.c.l.b16 %v808
    %v941 = vunpack.c.l.b16 %v809
    %v942 = vunpack.c.l.b16 %v810
    %v943 = vunpack.c.l.b16 %v811
    %v944 = vunpack.c.l.b16 %v812
    %v945 = vunpack.c.l.b16 %v813
    %v946 = vunpack.c.l.b16 %v814
    %v947 = vunpack.c.l.b16 %v815
    %v948 = vunpack.c.l.b16 %v816
    %v949 = vunpack.c.l.b16 %v817
    %v950 = vunpack.c.l.b16 %v818
    %v951 = vunpack.c.l.b16 %v819
    %v952 = vunpack.c.l.b16 %v820
    %v953 = vunpack.c.l.b16 %v821
    %v954 = vunpack.c.l.b16 %v822
    %v955 = vunpack.c.l.b16 %v823
    %v956 = vunpack.c.l.b16 %v824
    %v957 = vunpack.c.l.b16 %v825
    %v958 = vunpack.c.l.b16 %v826
    %v959 = vunpack.c.l.b16 %v827
    %v960 = vunpack.c.l.b16 %v828
    %v961 = vunpack.c.l.b16 %v829
    %v962 = vunpack.c.l.b16 %v830
    %v963 = vunpack.c.l.b16 %v831
    %v964 = vunpack.c.l.b16 %v832
    %v965 = vunpack.c.l.b16 %v833
    %v966 = vunpack.c.l.b16 %v834
    %v967 = vunpack.c.l.b16 %v835
    %v968 = vunpack.c.l.b16 %v836
    %v969 = vunpack.c.l.b16 %v837
    %v970 = vunpack.c.l.b16 %v838
    %v971 = vunpack.c.l.b16 %v839
    %v972 = vunpack.c.l.b16 %v840
    %v973 = vunpack.c.l.b16 %v841
    %v974 = vunpack.c.l.b16 %v842
    %v975 = vunpack.c.l.b16 %v843
    %v976 = vunpack.c.l.b16 %v844
    %v977 = vunpack.c.l.b16 %v845
    %v978 = vunpack.c.l.b16 %v846
    %v979 = vunpack.c.l.b16 %v847
    %v980 = vunpack.c.l.b16 %v848
    %v981 = vunpack.c.l.b16 %v849
    %v982 = vunpack.c.l.b16 %v850
    %v983 = vunpack.c.l.b16 %v851
    %v984 = vunpack.c.l.b16 %v852
    %v985 = vunpack.c.l.b16 %v853
    %v986 = vunpack.c.l.b16 %v854
    %v987 = vunpack.c.l.b16 %v855
    %v988 = vpack.c.b16 %v925, %v924
    %v989 = vpack.c.b16 %v927, %v926
    %v990 = vpack.c.b16 %v929, %v928
    %v991 = vpack.c.b16 %v931, %v930
    %v992 = vpack.c.b16 %v933, %v932
    %v993 = vpack.c.b16 %v935, %v934
    %v994 = vpack.c.b16 %v937, %v936
    %v995 = vpack.c.b16 %v939, %v938
    %v996 = vpack.c.b16 %v941, %v940
    %v997 = vpack.c.b16 %v943, %v942
    %v998 = vpack.c.b16 %v945, %v944
    %v999 = vpack.c.b16 %v947, %v946
    %v1000 = vpack.c.b16 %v949, %v948
    %v1001 = vpack.c.b16 %v951, %v950
    %v1002 = vpack.c.b16 %v953, %v952
    %v1003 = vpack.c.b16 %v955, %v954
    %v1004 = vpack.c.b16 %v957, %v956
    %v1005 = vpack.c.b16 %v959, %v958
    %v1006 = vpack.c.b16 %v961, %v960
    %v1007 = vpack.c.b16 %v963, %v962
    %v1008 = vpack.c.b16 %v965, %v964
    %v1009 = vpack.c.b16 %v967, %v966
    %v1010 = vpack.c.b16 %v969, %v968
    %v1011 = vpack.c.b16 %v971, %v970
    %v1012 = vpack.c.b16 %v973, %v972
    %v1013 = vpack.c.b16 %v975, %v974
    %v1014 = vpack.c.b16 %v977, %v976
    %v1015 = vpack.c.b16 %v979, %v978
    %v1016 = vpack.c.b16 %v981, %v980
    %v1017 = vpack.c.b16 %v983, %v982
    %v1018 = vpack.c.b16 %v985, %v984
    %v1019 = vpack.c.b16 %v987, %v986
    %1052 = vmatpush.bf16.msra.mxu0 %v995
    %1053 = vmatpush.bf16.msra.mxu0 %v994
    %1054 = vmatpush.bf16.msra.mxu0 %v993
    %1055 = vmatpush.bf16.msra.mxu0 %v992
    %1056 = vmatpush.bf16.msra.mxu0 %v991
    %1057 = vmatpush.bf16.msra.mxu0 %v990
    %1058 = vmatpush.bf16.msra.mxu0 %v989
    %1059 = vmatpush.bf16.msra.mxu0 %v988
    %1060 = vmatmul.bf16.gmra.mxu0 %v788
    %v1061 = vpop.f32.mrf.mxu0
    %v1062 = vadd.f32 %v858, %v1061
    %v1063 = vpop.f32.mrf.mxu0
    %1064 = vdwg.mxu0
    %1065 = vmatpush.bf16.msra.mxu0 %v1003
    %1066 = vmatpush.bf16.msra.mxu0 %v1002
    %1067 = vmatpush.bf16.msra.mxu0 %v1001
    %1068 = vmatpush.bf16.msra.mxu0 %v1000
    %1069 = vmatpush.bf16.msra.mxu0 %v999
    %1070 = vmatpush.bf16.msra.mxu0 %v998
    %1071 = vmatpush.bf16.msra.mxu0 %v997
    %1072 = vmatpush.bf16.msra.mxu0 %v996
    %1073 = vmatmul.bf16.gmra.mxu0 %v789
    %v1074 = vpop.f32.mrf.mxu0
    %v1075 = vadd.f32 %v1062, %v1074
    %v1076 = vpop.f32.mrf.mxu0
    %1077 = vdwg.mxu0
    %1078 = vmatpush.bf16.msra.mxu0 %v1011
    %1079 = vmatpush.bf16.msra.mxu0 %v1010
    %1080 = vmatpush.bf16.msra.mxu0 %v1009
    %1081 = vmatpush.bf16.msra.mxu0 %v1008
    %1082 = vmatpush.bf16.msra.mxu0 %v1007
    %1083 = vmatpush.bf16.msra.mxu0 %v1006
    %1084 = vmatpush.bf16.msra.mxu0 %v1005
    %1085 = vmatpush.bf16.msra.mxu0 %v1004
    %1086 = vmatmul.bf16.gmra.mxu0 %v790
    %v1087 = vpop.f32.mrf.mxu0
    %v1088 = vadd.f32 %v1075, %v1087
    %v1089 = vpop.f32.mrf.mxu0
    %1090 = vdwg.mxu0
    %1091 = vmatpush.bf16.msra.mxu0 %v1019
    %1092 = vmatpush.bf16.msra.mxu0 %v1018
    %1093 = vmatpush.bf16.msra.mxu0 %v1017
    %1094 = vmatpush.bf16.msra.mxu0 %v1016
    %1095 = vmatpush.bf16.msra.mxu0 %v1015
    %1096 = vmatpush.bf16.msra.mxu0 %v1014
    %1097 = vmatpush.bf16.msra.mxu0 %v1013
    %1098 = vmatpush.bf16.msra.mxu0 %v1012
    %1099 = vmatmul.bf16.gmra.mxu0 %v791
    %v1100 = vpop.f32.mrf.mxu0
    %v1101 = vadd.f32 %v1088, %v1100
    %v1102 = vpop.f32.mrf.mxu0
    %1103 = vdwg.mxu0
    %1104 = vst [vmem:[%s5] sm:$0xff] %v1101
    // Predicated region
    $region30: #{_lambda_.1} parent=1 // pred_check
      _
    $region31: #{_lambda_.1} parent=1 // pred_check_branch
      %1106 = sbr.rel (0) target = $region33
    $region32: #{_lambda_.1} parent=1 // pred_region
      _
    $region33: #{_lambda_.1} parent=1 // pred_fallthru
      _
    // Predicated region
    $region34: #{_lambda_.1} parent=1 // pred_check
      _
    $region35: #{_lambda_.1} parent=1 // pred_check_branch
      %1108 = sbr.rel (0) target = $region37
    $region36: #{_lambda_.1} parent=1 // pred_region
      _
    $region37: #{_lambda_.1} parent=1 // pred_fallthru
      _
    %1109 = vsyncpa [#allocation3], 1
    %1110 = vsyncpa [#allocation5], 1

</llo_original>
